<compile_context>
chip_gen: v7x
topology: tpu7x:2x2x1
jax: 0.10.0
libtpu: 0.0.40
codegen_flags: <defaults>
</compile_context>

<pallas_src>
import math

import jax
import jax.numpy as jnp
from jax.experimental import pallas as pl
from jax.experimental.pallas import tpu as pltpu

# ---------------------------------------------------------------------------
# Model config (small synthetic sizes consistent with the module)
# ---------------------------------------------------------------------------
BATCH = 2
SEQ = 8
HIDDEN = 32
NUM_HEADS = 4
HEAD_DIM = HIDDEN // NUM_HEADS
INTERMEDIATE = 4 * HIDDEN
NUM_LAYERS = 2
LN_EPS = 1e-12
SCALE = 1.0 / math.sqrt(HEAD_DIM)

# MXU operand dtype (f32 accumulation everywhere).
MXU_DTYPE = jnp.bfloat16

# Lane-dense output packing: fold PACK_G rows of width HIDDEN into one 128-lane
# row so the output store is an unmasked vst.  No-op when HIDDEN >= 128.
_PACK = (HIDDEN < 128) and (128 % HIDDEN == 0) and (SEQ % (128 // HIDDEN) == 0)
PACK_G = (128 // HIDDEN) if _PACK else 1
PACK_R = SEQ // PACK_G


# ---------------------------------------------------------------------------
# small math helpers (f32 VPU/EUP work)
# ---------------------------------------------------------------------------
def _layer_norm(x, gamma, beta):
    mean = jnp.mean(x, axis=-1, keepdims=True)
    var = jnp.mean((x - mean) ** 2, axis=-1, keepdims=True)
    return (x - mean) * jax.lax.rsqrt(var + LN_EPS) * gamma + beta


def _gelu_tanh(x):
    # tanh-approx GELU: tanh runs on the EUP slot instead of a VPU erf polynomial.
    c = math.sqrt(2.0 / math.pi)
    return 0.5 * x * (1.0 + jnp.tanh(c * (x + 0.044715 * x * x * x)))


def _gelu_erf(x):
    # exact erf GELU (reference only, matches torch.nn.functional.gelu default)
    return 0.5 * x * (1.0 + jax.lax.erf(x / jnp.sqrt(2.0).astype(x.dtype)))


def _pack_lanes(h):
    """(SEQ, HIDDEN) -> (PACK_R, 128): lane-dense packing for the output store."""
    if not _PACK:
        return h
    return jnp.concatenate(
        [h[g * PACK_R:(g + 1) * PACK_R, :] for g in range(PACK_G)], axis=1)


def _unpack_lanes(o):
    """Inverse of _pack_lanes on the trailing two dims (wrapper side, free)."""
    if not _PACK:
        return o
    lead = o.shape[:-2]
    return (o.reshape(*lead, PACK_R, PACK_G, HIDDEN)
             .swapaxes(-3, -2)
             .reshape(*lead, SEQ, HIDDEN))


# ---------------------------------------------------------------------------
# Fused Pallas kernel: one grid step == one BertLayer on one batch element
# ---------------------------------------------------------------------------
def uniter_encoder_kernel(
    x_ref, mask_ref,
    wqkv_ref, bqkv_ref, wao_ref, bao_ref, ln1g_ref, ln1b_ref,
    wi_ref, bi_ref, wo_ref, bo_ref, ln2g_ref, ln2b_ref,
    out_ref, h_ref,
):
    nH, dh, S = NUM_HEADS, HEAD_DIM, SEQ

    # Seed the VMEM-resident hidden state at layer 0 of this batch tile.
    @pl.when(pl.program_id(1) == 0)
    def _():
        h_ref[...] = x_ref[0]

    x = h_ref[...]                       # (S, H) f32, carried across layer steps
    xb = x.astype(MXU_DTYPE)

    # ---- fused, head-major Q/K/V projection (no in-kernel head de-interleave) ----
    x_h = jnp.broadcast_to(xb[None], (nH, S, HIDDEN))                  # (nH, S, H)
    qkv = jnp.einsum("hse,hed->hsd", x_h, wqkv_ref[0],
                     preferred_element_type=jnp.float32) + bqkv_ref[0]  # (nH, S, 3dh)
    q = qkv[..., 0 * dh:1 * dh].astype(MXU_DTYPE)
    k = qkv[..., 1 * dh:2 * dh].astype(MXU_DTYPE)
    v = qkv[..., 2 * dh:3 * dh].astype(MXU_DTYPE)

    # ---- attention: canonical single-batch-dim einsums over heads ----
    scores = jnp.einsum("hqd,hkd->hqk", q, k,
                        preferred_element_type=jnp.float32) * SCALE
    scores = scores + mask_ref[0]                    # (nH,1,S) mask, pre-broadcast
    scores = scores - jnp.max(scores, axis=-1, keepdims=True)
    e = jnp.exp(scores)
    probs = e / jnp.sum(e, axis=-1, keepdims=True)   # exact division (parity)
    ctx = jnp.einsum("hqk,hkd->hqd", probs.astype(MXU_DTYPE), v,
                     preferred_element_type=jnp.float32)               # (nH, S, dh)

    # ---- attention output dense with head-major weights: batched matmul + head-sum ----
    attn = jnp.einsum("hsd,hdo->hso", ctx.astype(MXU_DTYPE), wao_ref[0],
                      preferred_element_type=jnp.float32)              # (nH, S, H)
    attn_out = jnp.sum(attn, axis=0) + bao_ref[0]
    h1 = _layer_norm(attn_out + x, ln1g_ref[0], ln1b_ref[0])

    # ---- FFN: intermediate (GELU) + output dense + residual + LayerNorm ----
    inter = _gelu_tanh(jnp.dot(h1.astype(MXU_DTYPE), wi_ref[0],
                               preferred_element_type=jnp.float32) + bi_ref[0])
    ffn = jnp.dot(inter.astype(MXU_DTYPE), wo_ref[0],
                  preferred_element_type=jnp.float32) + bo_ref[0]
    h2 = _layer_norm(ffn + h1, ln2g_ref[0], ln2b_ref[0])

    # carry hidden state in VMEM; emit this layer's output lane-dense
    h_ref[...] = h2
    out_ref[0, 0] = _pack_lanes(h2).astype(out_ref.dtype)


# ---------------------------------------------------------------------------
# Wrapper: one pallas_call for the whole encoder stack
# ---------------------------------------------------------------------------
PARAM_ORDER = ["wqkv", "bqkv", "wao", "bao", "ln1g", "ln1b",
               "wi", "bi", "wo", "bo", "ln2g", "ln2b"]


def _weight_spec(p):
    nz = p.ndim - 1
    return pl.BlockSpec((1,) + p.shape[1:],
                        lambda b, l, _n=nz: (l,) + (0,) * _n)


def uniter_encoder_pallas(input_, attention_mask, stacked_params,
                          output_all_encoded_layers=True):
    """input_: [B, S, H]; attention_mask: binary [B, S] (1 = keep)."""
    B, S, H = input_.shape
    L = stacked_params["wqkv"].shape[0]
    nH = NUM_HEADS

    # Layer-invariant additive mask, pre-broadcast over heads (hoisted out of the kernel).
    ext = (1.0 - attention_mask.astype(jnp.float32)) * -10000.0        # (B, S)
    mask_h = jnp.broadcast_to(ext[:, None, None, :], (B, nH, 1, S))

    params = [stacked_params[k] for k in PARAM_ORDER]

    in_specs = [
        pl.BlockSpec((1, S, H), lambda b, l: (b, 0, 0)),        # input hidden states
        pl.BlockSpec((1, nH, 1, S), lambda b, l: (b, 0, 0, 0)),  # additive mask
    ] + [_weight_spec(p) for p in params]

    blk_out = (1, 1, PACK_R, PACK_G * H) if _PACK else (1, 1, S, H)

    if output_all_encoded_layers:
        out_shape = jax.ShapeDtypeStruct((L, B) + blk_out[2:], input_.dtype)
        out_spec = pl.BlockSpec(blk_out, lambda b, l: (l, b, 0, 0))
    else:
        # Single resident output block per batch tile: only the final layer is
        # ever written back to HBM.
        out_shape = jax.ShapeDtypeStruct((1, B) + blk_out[2:], input_.dtype)
        out_spec = pl.BlockSpec(blk_out, lambda b, l: (0, b, 0, 0))

    out = pl.pallas_call(
        uniter_encoder_kernel,
        out_shape=out_shape,
        grid_spec=pltpu.PrefetchScalarGridSpec(
            num_scalar_prefetch=0,
            grid=(B, L),                     # batch parallel (megacore), layers inner
            in_specs=in_specs,
            out_specs=out_spec,
            scratch_shapes=[pltpu.VMEM((S, H), jnp.float32)],
        ),
        compiler_params=pltpu.CompilerParams(
            dimension_semantics=("parallel", "arbitrary"),
            vmem_limit_bytes=32 * 1024 * 1024,
        ),
    )(input_, mask_h, *params)

    hidden = _unpack_lanes(out)              # (L or 1, B, S, H)
    if output_all_encoded_layers:
        return [hidden[l] for l in range(L)]
    return [hidden[0]]


# ---------------------------------------------------------------------------
# Pure-JAX f32 reference (same math as the PyTorch module) for correctness
# ---------------------------------------------------------------------------
def bert_layer_ref(x, ext_mask, p):
    q = x @ p["wq"] + p["bq"]
    k = x @ p["wk"] + p["bk"]
    v = x @ p["wv"] + p["bv"]
    B, S, H = x.shape

    def split(t):  # [B, S, H] -> [B, nH, S, dh]
        return t.reshape(B, S, NUM_HEADS, HEAD_DIM).transpose(0, 2, 1, 3)

    qh, kh, vh = split(q), split(k), split(v)
    scores = jnp.einsum("bhqd,bhkd->bhqk", qh, kh) * SCALE
    scores = scores + ext_mask[:, None, :, :]
    probs = jax.nn.softmax(scores, axis=-1)
    ctx = jnp.einsum("bhqk,bhkd->bhqd", probs, vh)
    ctx = ctx.transpose(0, 2, 1, 3).reshape(B, S, H)

    attn_out = ctx @ p["wao"] + p["bao"]
    h1 = _layer_norm(attn_out + x, p["ln1g"], p["ln1b"])
    inter = _gelu_erf(h1 @ p["wi"] + p["bi"])
    ffn = inter @ p["wo"] + p["bo"]
    return _layer_norm(ffn + h1, p["ln2g"], p["ln2b"])


def uniter_encoder_ref(x, attention_mask, layer_params):
    ext_mask = ((1.0 - attention_mask.astype(jnp.float32)) * -10000.0)[:, None, :]
    outs, h = [], x
    for p in layer_params:
        h = bert_layer_ref(h, ext_mask, p)
        outs.append(h)
    return outs


# ---------------------------------------------------------------------------
# Deterministic parameter init + head-major layer stacking / QKV fusion
# ---------------------------------------------------------------------------
def init_layer_params(key):
    ks = jax.random.split(key, 16)
    f32 = jnp.float32

    def w(k, shape, s=0.02):
        return jax.random.normal(k, shape, f32) * s

    return {
        "wq": w(ks[0], (HIDDEN, HIDDEN)), "bq": w(ks[1], (1, HIDDEN)),
        "wk": w(ks[2], (HIDDEN, HIDDEN)), "bk": w(ks[3], (1, HIDDEN)),
        "wv": w(ks[4], (HIDDEN, HIDDEN)), "bv": w(ks[5], (1, HIDDEN)),
        "wao": w(ks[6], (HIDDEN, HIDDEN)), "bao": w(ks[7], (1, HIDDEN)),
        "ln1g": 1.0 + w(ks[8], (1, HIDDEN), 0.1), "ln1b": w(ks[9], (1, HIDDEN), 0.1),
        "wi": w(ks[10], (HIDDEN, INTERMEDIATE)), "bi": w(ks[11], (1, INTERMEDIATE)),
        "wo": w(ks[12], (INTERMEDIATE, HIDDEN)), "bo": w(ks[13], (1, HIDDEN)),
        "ln2g": 1.0 + w(ks[14], (1, HIDDEN), 0.1), "ln2b": w(ks[15], (1, HIDDEN), 0.1),
    }


def stack_layer_params(per_layer):
    """Head-major QKV fusion + per-layer stacking; matmul weights cast to bf16."""
    nH, dh = NUM_HEADS, HEAD_DIM

    def qkv_w(p):  # -> (nH, H, 3*dh), columns [q | k | v] per head
        wq = p["wq"].reshape(HIDDEN, nH, dh)
        wk = p["wk"].reshape(HIDDEN, nH, dh)
        wv = p["wv"].reshape(HIDDEN, nH, dh)
        return jnp.concatenate([wq, wk, wv], axis=-1).transpose(1, 0, 2)

    def qkv_b(p):  # -> (nH, 1, 3*dh)
        bq = p["bq"].reshape(nH, dh)
        bk = p["bk"].reshape(nH, dh)
        bv = p["bv"].reshape(nH, dh)
        return jnp.concatenate([bq, bk, bv], axis=-1)[:, None, :]

    stacked = {
        "wqkv": jnp.stack([qkv_w(p) for p in per_layer]).astype(MXU_DTYPE),
        "bqkv": jnp.stack([qkv_b(p) for p in per_layer]),
        "wao": jnp.stack([p["wao"].reshape(nH, dh, HIDDEN)
                          for p in per_layer]).astype(MXU_DTYPE),
        "wi": jnp.stack([p["wi"] for p in per_layer]).astype(MXU_DTYPE),
        "wo": jnp.stack([p["wo"] for p in per_layer]).astype(MXU_DTYPE),
    }
    for key in ["bao", "ln1g", "ln1b", "bi", "bo", "ln2g", "ln2b"]:
        stacked[key] = jnp.stack([p[key] for p in per_layer])
    return stacked


if __name__ == "__main__":
    root = jax.random.PRNGKey(0)
    k_in, k_mask, *k_layers = jax.random.split(root, 2 + NUM_LAYERS)

    x = jax.random.normal(k_in, (BATCH, SEQ, HIDDEN), jnp.float32)
    # binary attention mask: last 2 tokens of batch 1 are padding
    attention_mask = jnp.ones((BATCH, SEQ), jnp.float32)
    attention_mask = attention_mask.at[1, -2:].set(0.0)

    layer_params = [init_layer_params(k) for k in k_layers]
    stacked_params = stack_layer_params(layer_params)

    # output_all_encoded_layers=True path
    outs = uniter_encoder_pallas(x, attention_mask, stacked_params,
                                 output_all_encoded_layers=True)
    outs = [jax.block_until_ready(o) for o in outs]

    refs = uniter_encoder_ref(x, attention_mask, layer_params)
    for o, r in zip(outs, refs):
        assert o.shape == r.shape == (BATCH, SEQ, HIDDEN)
        # tolerance covers bf16 MXU operands + tanh-approx GELU vs. f32/erf reference
        assert jnp.allclose(o, r, atol=2e-2, rtol=2e-2), "mismatch vs reference"

    # output_all_encoded_layers=False path (single HBM writeback)
    last = uniter_encoder_pallas(x, attention_mask, stacked_params,
                                 output_all_encoded_layers=False)
    last = [jax.block_until_ready(o) for o in last]
    assert len(last) == 1 and last[0].shape == (BATCH, SEQ, HIDDEN)
    assert jnp.allclose(last[0], outs[-1], atol=1e-5, rtol=1e-5)

    print("KERNEL_OK")
</pallas_src>

<mosaic_0001>
module attributes {stable_mosaic.version = 11 : i64} {
  func.func @uniter_encoder_kernel(%arg0: i32, %arg1: i32, %arg2: memref<1x8x32xf32, #tpu.memory_space<vmem>>, %arg3: memref<1x4x1x8xf32, #tpu.memory_space<vmem>>, %arg4: memref<1x4x32x24xbf16, #tpu.memory_space<vmem>>, %arg5: memref<1x4x1x24xf32, #tpu.memory_space<vmem>>, %arg6: memref<1x4x8x32xbf16, #tpu.memory_space<vmem>>, %arg7: memref<1x1x32xf32, #tpu.memory_space<vmem>>, %arg8: memref<1x1x32xf32, #tpu.memory_space<vmem>>, %arg9: memref<1x1x32xf32, #tpu.memory_space<vmem>>, %arg10: memref<1x32x128xbf16, #tpu.memory_space<vmem>>, %arg11: memref<1x1x128xf32, #tpu.memory_space<vmem>>, %arg12: memref<1x128x32xbf16, #tpu.memory_space<vmem>>, %arg13: memref<1x1x32xf32, #tpu.memory_space<vmem>>, %arg14: memref<1x1x32xf32, #tpu.memory_space<vmem>>, %arg15: memref<1x1x32xf32, #tpu.memory_space<vmem>>, %arg16: memref<1x1x2x128xf32, #tpu.memory_space<vmem>>, %arg17: memref<8x32xf32, #tpu.memory_space<vmem>>) attributes {dimension_semantics = [#tpu.dimension_semantics<parallel>, #tpu.dimension_semantics<arbitrary>], iteration_bounds = array<i64: 2, 2>, scalar_prefetch = 0 : i64, scratch_operands = 1 : i64, tpu.core_type = #tpu.core_type<tc>, window_params = [{transform_indices = @transform_0, window_bounds = array<i64: 1, 8, 32>}, {transform_indices = @transform_1, window_bounds = array<i64: 1, 4, 1, 8>}, {transform_indices = @transform_2, window_bounds = array<i64: 1, 4, 32, 24>}, {transform_indices = @transform_3, window_bounds = array<i64: 1, 4, 1, 24>}, {transform_indices = @transform_4, window_bounds = array<i64: 1, 4, 8, 32>}, {transform_indices = @transform_5, window_bounds = array<i64: 1, 1, 32>}, {transform_indices = @transform_6, window_bounds = array<i64: 1, 1, 32>}, {transform_indices = @transform_7, window_bounds = array<i64: 1, 1, 32>}, {transform_indices = @transform_8, window_bounds = array<i64: 1, 32, 128>}, {transform_indices = @transform_9, window_bounds = array<i64: 1, 1, 128>}, {transform_indices = @transform_10, window_bounds = array<i64: 1, 128, 32>}, {transform_indices = @transform_11, window_bounds = array<i64: 1, 1, 32>}, {transform_indices = @transform_12, window_bounds = array<i64: 1, 1, 32>}, {transform_indices = @transform_13, window_bounds = array<i64: 1, 1, 32>}, {transform_indices = @transform_14, window_bounds = array<i64: 1, 1, 2, 128>}]} {
    %c0_i32 = arith.constant 0 : i32
    %0 = arith.cmpi eq, %arg1, %c0_i32 : i32
    %1 = arith.extui %0 : i1 to i32
    %c0_i32_0 = arith.constant 0 : i32
    %2 = arith.cmpi ne, %1, %c0_i32_0 : i32
    scf.if %2 {
      %c0_74 = arith.constant 0 : index
      %c0_75 = arith.constant 0 : index
      %c0_76 = arith.constant 0 : index
      %140 = vector.load %arg2[%c0_74, %c0_75, %c0_76] : memref<1x8x32xf32, #tpu.memory_space<vmem>>, vector<1x8x32xf32>
      %141 = vector.shape_cast %140 : vector<1x8x32xf32> to vector<8x32xf32>
      %c0_77 = arith.constant 0 : index
      %c0_78 = arith.constant 0 : index
      %142 = vector.load %arg17[%c0_77, %c0_78] : memref<8x32xf32, #tpu.memory_space<vmem>>, vector<8x32xf32>
      tpu.vector_store %arg17[%c0_77, %c0_78], %141 {strides = array<i32>} : memref<8x32xf32, #tpu.memory_space<vmem>>, vector<8x32xf32>,
    } else {
    }
    %c0 = arith.constant 0 : index
    %c0_1 = arith.constant 0 : index
    %3 = vector.load %arg17[%c0, %c0_1] : memref<8x32xf32, #tpu.memory_space<vmem>>, vector<8x32xf32>
    %4 = arith.truncf %3 : vector<8x32xf32> to vector<8x32xbf16>
    %5 = vector.shape_cast %4 : vector<8x32xbf16> to vector<1x8x32xbf16>
    %6 = vector.shape_cast %5 : vector<1x8x32xbf16> to vector<1x8x32xbf16>
    %7 = vector.broadcast %6 : vector<1x8x32xbf16> to vector<4x8x32xbf16>
    %c0_2 = arith.constant 0 : index
    %c0_3 = arith.constant 0 : index
    %c0_4 = arith.constant 0 : index
    %c0_5 = arith.constant 0 : index
    %8 = vector.load %arg4[%c0_2, %c0_3, %c0_4, %c0_5] : memref<1x4x32x24xbf16, #tpu.memory_space<vmem>>, vector<1x4x32x24xbf16>
    %9 = vector.shape_cast %8 : vector<1x4x32x24xbf16> to vector<4x32x24xbf16>
    "tpu.trace_start"() <{level = 10 : i32, message = "hse,hed->hsd"}> : () -> ()
    %cst = arith.constant dense<0.000000e+00> : vector<4x8x24xf32>
    %10 = tpu.matmul %7, %9, %cst {dimension_numbers = #tpu.dot_dimension_numbers<[2], [1], [1], [2], [0, 0, 0, 1, 1, 2], [0], [0]>} : vector<4x8x32xbf16>, vector<4x32x24xbf16>, vector<4x8x24xf32> -> vector<4x8x24xf32>
    "tpu.trace_stop"() : () -> ()
    %c0_6 = arith.constant 0 : index
    %c0_7 = arith.constant 0 : index
    %c0_8 = arith.constant 0 : index
    %c0_9 = arith.constant 0 : index
    %11 = vector.load %arg5[%c0_6, %c0_7, %c0_8, %c0_9] : memref<1x4x1x24xf32, #tpu.memory_space<vmem>>, vector<1x4x1x24xf32>
    %12 = vector.shape_cast %11 : vector<1x4x1x24xf32> to vector<4x1x24xf32>
    %13 = vector.broadcast %12 : vector<4x1x24xf32> to vector<4x8x24xf32>
    %14 = arith.addf %10, %13 : vector<4x8x24xf32>
    %15 = vector.extract_strided_slice %14 {offsets = [0, 0, 0], sizes = [4, 8, 8], strides = [1, 1, 1]} : vector<4x8x24xf32> to vector<4x8x8xf32>
    %16 = arith.truncf %15 : vector<4x8x8xf32> to vector<4x8x8xbf16>
    %17 = vector.extract_strided_slice %14 {offsets = [0, 0, 8], sizes = [4, 8, 8], strides = [1, 1, 1]} : vector<4x8x24xf32> to vector<4x8x8xf32>
    %18 = arith.truncf %17 : vector<4x8x8xf32> to vector<4x8x8xbf16>
    %19 = vector.extract_strided_slice %14 {offsets = [0, 0, 16], sizes = [4, 8, 8], strides = [1, 1, 1]} : vector<4x8x24xf32> to vector<4x8x8xf32>
    %20 = arith.truncf %19 : vector<4x8x8xf32> to vector<4x8x8xbf16>
    "tpu.trace_start"() <{level = 10 : i32, message = "hqd,hkd->hqk"}> : () -> ()
    %cst_10 = arith.constant dense<0.000000e+00> : vector<4x8x8xf32>
    %21 = tpu.matmul %16, %18, %cst_10 {dimension_numbers = #tpu.dot_dimension_numbers<[2], [2], [1], [1], [0, 0, 0, 1, 1, 1], [0], [0]>} : vector<4x8x8xbf16>, vector<4x8x8xbf16>, vector<4x8x8xf32> -> vector<4x8x8xf32>
    "tpu.trace_stop"() : () -> ()
    %cst_11 = arith.constant 0.353553385 : f32
    %22 = vector.broadcast %cst_11 : f32 to vector<4x8x8xf32>
    %23 = arith.mulf %21, %22 : vector<4x8x8xf32>
    %c0_12 = arith.constant 0 : index
    %c0_13 = arith.constant 0 : index
    %c0_14 = arith.constant 0 : index
    %c0_15 = arith.constant 0 : index
    %24 = vector.load %arg3[%c0_12, %c0_13, %c0_14, %c0_15] : memref<1x4x1x8xf32, #tpu.memory_space<vmem>>, vector<1x4x1x8xf32>
    %25 = vector.shape_cast %24 : vector<1x4x1x8xf32> to vector<4x1x8xf32>
    %26 = vector.broadcast %25 : vector<4x1x8xf32> to vector<4x8x8xf32>
    %27 = arith.addf %23, %26 : vector<4x8x8xf32>
    %cst_16 = arith.constant dense<0xFF800000> : vector<4x8xf32>
    %28 = vector.multi_reduction <maximumf>, %27, %cst_16 [2] : vector<4x8x8xf32> to vector<4x8xf32>
    %29 = vector.shape_cast %28 : vector<4x8xf32> to vector<4x8x1xf32>
    %30 = vector.broadcast %29 : vector<4x8x1xf32> to vector<4x8x8xf32>
    %31 = arith.subf %27, %30 : vector<4x8x8xf32>
    %32 = math.exp %31 : vector<4x8x8xf32>
    %cst_17 = arith.constant dense<0.000000e+00> : vector<4x8xf32>
    %33 = vector.multi_reduction <add>, %32, %cst_17 [2] : vector<4x8x8xf32> to vector<4x8xf32>
    %34 = vector.shape_cast %33 : vector<4x8xf32> to vector<4x8x1xf32>
    %35 = vector.broadcast %34 : vector<4x8x1xf32> to vector<4x8x8xf32>
    %36 = arith.divf %32, %35 : vector<4x8x8xf32>
    %37 = arith.truncf %36 : vector<4x8x8xf32> to vector<4x8x8xbf16>
    "tpu.trace_start"() <{level = 10 : i32, message = "hqk,hkd->hqd"}> : () -> ()
    %cst_18 = arith.constant dense<0.000000e+00> : vector<4x8x8xf32>
    %38 = tpu.matmul %37, %20, %cst_18 {dimension_numbers = #tpu.dot_dimension_numbers<[2], [1], [1], [2], [0, 0, 0, 1, 1, 2], [0], [0]>} : vector<4x8x8xbf16>, vector<4x8x8xbf16>, vector<4x8x8xf32> -> vector<4x8x8xf32>
    "tpu.trace_stop"() : () -> ()
    %39 = arith.truncf %38 : vector<4x8x8xf32> to vector<4x8x8xbf16>
    %c0_19 = arith.constant 0 : index
    %c0_20 = arith.constant 0 : index
    %c0_21 = arith.constant 0 : index
    %c0_22 = arith.constant 0 : index
    %40 = vector.load %arg6[%c0_19, %c0_20, %c0_21, %c0_22] : memref<1x4x8x32xbf16, #tpu.memory_space<vmem>>, vector<1x4x8x32xbf16>
    %41 = vector.shape_cast %40 : vector<1x4x8x32xbf16> to vector<4x8x32xbf16>
    "tpu.trace_start"() <{level = 10 : i32, message = "hsd,hdo->hso"}> : () -> ()
    %cst_23 = arith.constant dense<0.000000e+00> : vector<4x8x32xf32>
    %42 = tpu.matmul %39, %41, %cst_23 {dimension_numbers = #tpu.dot_dimension_numbers<[2], [1], [1], [2], [0, 0, 0, 1, 1, 2], [0], [0]>} : vector<4x8x8xbf16>, vector<4x8x32xbf16>, vector<4x8x32xf32> -> vector<4x8x32xf32>
    "tpu.trace_stop"() : () -> ()
    %cst_24 = arith.constant dense<0.000000e+00> : vector<8x32xf32>
    %43 = vector.multi_reduction <add>, %42, %cst_24 [0] : vector<4x8x32xf32> to vector<8x32xf32>
    %c0_25 = arith.constant 0 : index
    %c0_26 = arith.constant 0 : index
    %c0_27 = arith.constant 0 : index
    %44 = vector.load %arg7[%c0_25, %c0_26, %c0_27] : memref<1x1x32xf32, #tpu.memory_space<vmem>>, vector<1x1x32xf32>
    %45 = vector.shape_cast %44 : vector<1x1x32xf32> to vector<1x32xf32>
    %46 = vector.broadcast %45 : vector<1x32xf32> to vector<8x32xf32>
    %47 = arith.addf %43, %46 : vector<8x32xf32>
    %48 = arith.addf %47, %3 : vector<8x32xf32>
    %c0_28 = arith.constant 0 : index
    %c0_29 = arith.constant 0 : index
    %c0_30 = arith.constant 0 : index
    %49 = vector.load %arg8[%c0_28, %c0_29, %c0_30] : memref<1x1x32xf32, #tpu.memory_space<vmem>>, vector<1x1x32xf32>
    %50 = vector.shape_cast %49 : vector<1x1x32xf32> to vector<1x32xf32>
    %c0_31 = arith.constant 0 : index
    %c0_32 = arith.constant 0 : index
    %c0_33 = arith.constant 0 : index
    %51 = vector.load %arg9[%c0_31, %c0_32, %c0_33] : memref<1x1x32xf32, #tpu.memory_space<vmem>>, vector<1x1x32xf32>
    %52 = vector.shape_cast %51 : vector<1x1x32xf32> to vector<1x32xf32>
    %cst_34 = arith.constant dense<0.000000e+00> : vector<8xf32>
    %53 = vector.multi_reduction <add>, %48, %cst_34 [1] : vector<8x32xf32> to vector<8xf32>
    %54 = vector.shape_cast %53 : vector<8xf32> to vector<8x1xf32>
    %cst_35 = arith.constant 3.200000e+01 : f32
    %55 = vector.broadcast %cst_35 : f32 to vector<8x1xf32>
    %56 = arith.divf %54, %55 : vector<8x1xf32>
    %57 = vector.broadcast %56 : vector<8x1xf32> to vector<8x32xf32>
    %58 = arith.subf %48, %57 : vector<8x32xf32>
    %59 = arith.mulf %58, %58 : vector<8x32xf32>
    %cst_36 = arith.constant dense<0.000000e+00> : vector<8xf32>
    %60 = vector.multi_reduction <add>, %59, %cst_36 [1] : vector<8x32xf32> to vector<8xf32>
    %61 = vector.shape_cast %60 : vector<8xf32> to vector<8x1xf32>
    %cst_37 = arith.constant 3.200000e+01 : f32
    %62 = vector.broadcast %cst_37 : f32 to vector<8x1xf32>
    %63 = arith.divf %61, %62 : vector<8x1xf32>
    %64 = vector.broadcast %56 : vector<8x1xf32> to vector<8x32xf32>
    %65 = arith.subf %48, %64 : vector<8x32xf32>
    %cst_38 = arith.constant 9.99999996E-13 : f32
    %66 = vector.broadcast %cst_38 : f32 to vector<8x1xf32>
    %67 = arith.addf %63, %66 : vector<8x1xf32>
    %68 = math.rsqrt %67 : vector<8x1xf32>
    %69 = vector.broadcast %68 : vector<8x1xf32> to vector<8x32xf32>
    %70 = arith.mulf %65, %69 : vector<8x32xf32>
    %71 = vector.broadcast %50 : vector<1x32xf32> to vector<8x32xf32>
    %72 = arith.mulf %70, %71 : vector<8x32xf32>
    %73 = vector.broadcast %52 : vector<1x32xf32> to vector<8x32xf32>
    %74 = arith.addf %72, %73 : vector<8x32xf32>
    %75 = arith.truncf %74 : vector<8x32xf32> to vector<8x32xbf16>
    %c0_39 = arith.constant 0 : index
    %c0_40 = arith.constant 0 : index
    %c0_41 = arith.constant 0 : index
    %76 = vector.load %arg10[%c0_39, %c0_40, %c0_41] : memref<1x32x128xbf16, #tpu.memory_space<vmem>>, vector<1x32x128xbf16>
    %77 = vector.shape_cast %76 : vector<1x32x128xbf16> to vector<32x128xbf16>
    %cst_42 = arith.constant dense<0.000000e+00> : vector<8x128xf32>
    %78 = tpu.matmul %75, %77, %cst_42 {dimension_numbers = #tpu.dot_dimension_numbers<[1], [0], [0], [1], [0, 0, 1, 1], [], []>} : vector<8x32xbf16>, vector<32x128xbf16>, vector<8x128xf32> -> vector<8x128xf32>
    %c0_43 = arith.constant 0 : index
    %c0_44 = arith.constant 0 : index
    %c0_45 = arith.constant 0 : index
    %79 = vector.load %arg11[%c0_43, %c0_44, %c0_45] : memref<1x1x128xf32, #tpu.memory_space<vmem>>, vector<1x1x128xf32>
    %80 = vector.shape_cast %79 : vector<1x1x128xf32> to vector<1x128xf32>
    %81 = vector.broadcast %80 : vector<1x128xf32> to vector<8x128xf32>
    %82 = arith.addf %78, %81 : vector<8x128xf32>
    %cst_46 = arith.constant 5.000000e-01 : f32
    %83 = vector.broadcast %cst_46 : f32 to vector<8x128xf32>
    %84 = arith.mulf %83, %82 : vector<8x128xf32>
    %cst_47 = arith.constant 4.471500e-02 : f32
    %85 = vector.broadcast %cst_47 : f32 to vector<8x128xf32>
    %86 = arith.mulf %85, %82 : vector<8x128xf32>
    %87 = arith.mulf %86, %82 : vector<8x128xf32>
    %88 = arith.mulf %87, %82 : vector<8x128xf32>
    %89 = arith.addf %82, %88 : vector<8x128xf32>
    %cst_48 = arith.constant 0.797884583 : f32
    %90 = vector.broadcast %cst_48 : f32 to vector<8x128xf32>
    %91 = arith.mulf %90, %89 : vector<8x128xf32>
    %92 = math.tanh %91 : vector<8x128xf32>
    %cst_49 = arith.constant 1.000000e+00 : f32
    %93 = vector.broadcast %cst_49 : f32 to vector<8x128xf32>
    %94 = arith.addf %93, %92 : vector<8x128xf32>
    %95 = arith.mulf %84, %94 : vector<8x128xf32>
    %96 = arith.truncf %95 : vector<8x128xf32> to vector<8x128xbf16>
    %c0_50 = arith.constant 0 : index
    %c0_51 = arith.constant 0 : index
    %c0_52 = arith.constant 0 : index
    %97 = vector.load %arg12[%c0_50, %c0_51, %c0_52] : memref<1x128x32xbf16, #tpu.memory_space<vmem>>, vector<1x128x32xbf16>
    %98 = vector.shape_cast %97 : vector<1x128x32xbf16> to vector<128x32xbf16>
    %cst_53 = arith.constant dense<0.000000e+00> : vector<8x32xf32>
    %99 = tpu.matmul %96, %98, %cst_53 {dimension_numbers = #tpu.dot_dimension_numbers<[1], [0], [0], [1], [0, 0, 1, 1], [], []>} : vector<8x128xbf16>, vector<128x32xbf16>, vector<8x32xf32> -> vector<8x32xf32>
    %c0_54 = arith.constant 0 : index
    %c0_55 = arith.constant 0 : index
    %c0_56 = arith.constant 0 : index
    %100 = vector.load %arg13[%c0_54, %c0_55, %c0_56] : memref<1x1x32xf32, #tpu.memory_space<vmem>>, vector<1x1x32xf32>
    %101 = vector.shape_cast %100 : vector<1x1x32xf32> to vector<1x32xf32>
    %102 = vector.broadcast %101 : vector<1x32xf32> to vector<8x32xf32>
    %103 = arith.addf %99, %102 : vector<8x32xf32>
    %104 = arith.addf %103, %74 : vector<8x32xf32>
    %c0_57 = arith.constant 0 : index
    %c0_58 = arith.constant 0 : index
    %c0_59 = arith.constant 0 : index
    %105 = vector.load %arg14[%c0_57, %c0_58, %c0_59] : memref<1x1x32xf32, #tpu.memory_space<vmem>>, vector<1x1x32xf32>
    %106 = vector.shape_cast %105 : vector<1x1x32xf32> to vector<1x32xf32>
    %c0_60 = arith.constant 0 : index
    %c0_61 = arith.constant 0 : index
    %c0_62 = arith.constant 0 : index
    %107 = vector.load %arg15[%c0_60, %c0_61, %c0_62] : memref<1x1x32xf32, #tpu.memory_space<vmem>>, vector<1x1x32xf32>
    %108 = vector.shape_cast %107 : vector<1x1x32xf32> to vector<1x32xf32>
    %cst_63 = arith.constant dense<0.000000e+00> : vector<8xf32>
    %109 = vector.multi_reduction <add>, %104, %cst_63 [1] : vector<8x32xf32> to vector<8xf32>
    %110 = vector.shape_cast %109 : vector<8xf32> to vector<8x1xf32>
    %cst_64 = arith.constant 3.200000e+01 : f32
    %111 = vector.broadcast %cst_64 : f32 to vector<8x1xf32>
    %112 = arith.divf %110, %111 : vector<8x1xf32>
    %113 = vector.broadcast %112 : vector<8x1xf32> to vector<8x32xf32>
    %114 = arith.subf %104, %113 : vector<8x32xf32>
    %115 = arith.mulf %114, %114 : vector<8x32xf32>
    %cst_65 = arith.constant dense<0.000000e+00> : vector<8xf32>
    %116 = vector.multi_reduction <add>, %115, %cst_65 [1] : vector<8x32xf32> to vector<8xf32>
    %117 = vector.shape_cast %116 : vector<8xf32> to vector<8x1xf32>
    %cst_66 = arith.constant 3.200000e+01 : f32
    %118 = vector.broadcast %cst_66 : f32 to vector<8x1xf32>
    %119 = arith.divf %117, %118 : vector<8x1xf32>
    %120 = vector.broadcast %112 : vector<8x1xf32> to vector<8x32xf32>
    %121 = arith.subf %104, %120 : vector<8x32xf32>
    %cst_67 = arith.constant 9.99999996E-13 : f32
    %122 = vector.broadcast %cst_67 : f32 to vector<8x1xf32>
    %123 = arith.addf %119, %122 : vector<8x1xf32>
    %124 = math.rsqrt %123 : vector<8x1xf32>
    %125 = vector.broadcast %124 : vector<8x1xf32> to vector<8x32xf32>
    %126 = arith.mulf %121, %125 : vector<8x32xf32>
    %127 = vector.broadcast %106 : vector<1x32xf32> to vector<8x32xf32>
    %128 = arith.mulf %126, %127 : vector<8x32xf32>
    %129 = vector.broadcast %108 : vector<1x32xf32> to vector<8x32xf32>
    %130 = arith.addf %128, %129 : vector<8x32xf32>
    %c0_68 = arith.constant 0 : index
    %c0_69 = arith.constant 0 : index
    %131 = vector.load %arg17[%c0_68, %c0_69] : memref<8x32xf32, #tpu.memory_space<vmem>>, vector<8x32xf32>
    tpu.vector_store %arg17[%c0_68, %c0_69], %130 {strides = array<i32>} : memref<8x32xf32, #tpu.memory_space<vmem>>, vector<8x32xf32>,
    %132 = vector.extract_strided_slice %130 {offsets = [0, 0], sizes = [2, 32], strides = [1, 1]} : vector<8x32xf32> to vector<2x32xf32>
    %133 = vector.extract_strided_slice %130 {offsets = [2, 0], sizes = [2, 32], strides = [1, 1]} : vector<8x32xf32> to vector<2x32xf32>
    %134 = vector.extract_strided_slice %130 {offsets = [4, 0], sizes = [2, 32], strides = [1, 1]} : vector<8x32xf32> to vector<2x32xf32>
    %135 = vector.extract_strided_slice %130 {offsets = [6, 0], sizes = [2, 32], strides = [1, 1]} : vector<8x32xf32> to vector<2x32xf32>
    %136 = tpu.concatenate %132, %133, %134, %135 in 1 : vector<2x32xf32>, vector<2x32xf32>, vector<2x32xf32>, vector<2x32xf32> -> vector<2x128xf32>
    %c0_70 = arith.constant 0 : index
    %c0_71 = arith.constant 0 : index
    %c0_72 = arith.constant 0 : index
    %c0_73 = arith.constant 0 : index
    %137 = vector.load %arg16[%c0_70, %c0_71, %c0_72, %c0_73] : memref<1x1x2x128xf32, #tpu.memory_space<vmem>>, vector<1x1x2x128xf32>
    %138 = vector.shape_cast %137 : vector<1x1x2x128xf32> to vector<2x128xf32>
    %139 = vector.shape_cast %136 : vector<2x128xf32> to vector<1x1x2x128xf32>
    tpu.vector_store %arg16[%c0_70, %c0_71, %c0_72, %c0_73], %139 {strides = array<i32>} : memref<1x1x2x128xf32, #tpu.memory_space<vmem>>, vector<1x1x2x128xf32>,
    return
  }
  func.func @transform_0(%arg0: i32, %arg1: i32) -> (i32, i32, i32) {
    %c0_i32 = arith.constant 0 : i32
    %c0_i32_0 = arith.constant 0 : i32
    %c0_i32_1 = arith.constant 0 : i32
    return %arg0, %c0_i32, %c0_i32_0 : i32, i32, i32
  }
  func.func @transform_1(%arg0: i32, %arg1: i32) -> (i32, i32, i32, i32) {
    %c0_i32 = arith.constant 0 : i32
    %c0_i32_0 = arith.constant 0 : i32
    %c0_i32_1 = arith.constant 0 : i32
    %c0_i32_2 = arith.constant 0 : i32
    return %arg0, %c0_i32, %c0_i32_0, %c0_i32_1 : i32, i32, i32, i32
  }
  func.func @transform_2(%arg0: i32, %arg1: i32) -> (i32, i32, i32, i32) {
    %c0_i32 = arith.constant 0 : i32
    %c0_i32_0 = arith.constant 0 : i32
    %c0_i32_1 = arith.constant 0 : i32
    %c0_i32_2 = arith.constant 0 : i32
    return %arg1, %c0_i32, %c0_i32_0, %c0_i32_1 : i32, i32, i32, i32
  }
  func.func @transform_3(%arg0: i32, %arg1: i32) -> (i32, i32, i32, i32) {
    %c0_i32 = arith.constant 0 : i32
    %c0_i32_0 = arith.constant 0 : i32
    %c0_i32_1 = arith.constant 0 : i32
    %c0_i32_2 = arith.constant 0 : i32
    return %arg1, %c0_i32, %c0_i32_0, %c0_i32_1 : i32, i32, i32, i32
  }
  func.func @transform_4(%arg0: i32, %arg1: i32) -> (i32, i32, i32, i32) {
    %c0_i32 = arith.constant 0 : i32
    %c0_i32_0 = arith.constant 0 : i32
    %c0_i32_1 = arith.constant 0 : i32
    %c0_i32_2 = arith.constant 0 : i32
    return %arg1, %c0_i32, %c0_i32_0, %c0_i32_1 : i32, i32, i32, i32
  }
  func.func @transform_5(%arg0: i32, %arg1: i32) -> (i32, i32, i32) {
    %c0_i32 = arith.constant 0 : i32
    %c0_i32_0 = arith.constant 0 : i32
    %c0_i32_1 = arith.constant 0 : i32
    return %arg1, %c0_i32, %c0_i32_0 : i32, i32, i32
  }
  func.func @transform_6(%arg0: i32, %arg1: i32) -> (i32, i32, i32) {
    %c0_i32 = arith.constant 0 : i32
    %c0_i32_0 = arith.constant 0 : i32
    %c0_i32_1 = arith.constant 0 : i32
    return %arg1, %c0_i32, %c0_i32_0 : i32, i32, i32
  }
  func.func @transform_7(%arg0: i32, %arg1: i32) -> (i32, i32, i32) {
    %c0_i32 = arith.constant 0 : i32
    %c0_i32_0 = arith.constant 0 : i32
    %c0_i32_1 = arith.constant 0 : i32
    return %arg1, %c0_i32, %c0_i32_0 : i32, i32, i32
  }
  func.func @transform_8(%arg0: i32, %arg1: i32) -> (i32, i32, i32) {
    %c0_i32 = arith.constant 0 : i32
    %c0_i32_0 = arith.constant 0 : i32
    %c0_i32_1 = arith.constant 0 : i32
    return %arg1, %c0_i32, %c0_i32_0 : i32, i32, i32
  }
  func.func @transform_9(%arg0: i32, %arg1: i32) -> (i32, i32, i32) {
    %c0_i32 = arith.constant 0 : i32
    %c0_i32_0 = arith.constant 0 : i32
    %c0_i32_1 = arith.constant 0 : i32
    return %arg1, %c0_i32, %c0_i32_0 : i32, i32, i32
  }
  func.func @transform_10(%arg0: i32, %arg1: i32) -> (i32, i32, i32) {
    %c0_i32 = arith.constant 0 : i32
    %c0_i32_0 = arith.constant 0 : i32
    %c0_i32_1 = arith.constant 0 : i32
    return %arg1, %c0_i32, %c0_i32_0 : i32, i32, i32
  }
  func.func @transform_11(%arg0: i32, %arg1: i32) -> (i32, i32, i32) {
    %c0_i32 = arith.constant 0 : i32
    %c0_i32_0 = arith.constant 0 : i32
    %c0_i32_1 = arith.constant 0 : i32
    return %arg1, %c0_i32, %c0_i32_0 : i32, i32, i32
  }
  func.func @transform_12(%arg0: i32, %arg1: i32) -> (i32, i32, i32) {
    %c0_i32 = arith.constant 0 : i32
    %c0_i32_0 = arith.constant 0 : i32
    %c0_i32_1 = arith.constant 0 : i32
    return %arg1, %c0_i32, %c0_i32_0 : i32, i32, i32
  }
  func.func @transform_13(%arg0: i32, %arg1: i32) -> (i32, i32, i32) {
    %c0_i32 = arith.constant 0 : i32
    %c0_i32_0 = arith.constant 0 : i32
    %c0_i32_1 = arith.constant 0 : i32
    return %arg1, %c0_i32, %c0_i32_0 : i32, i32, i32
  }
  func.func @transform_14(%arg0: i32, %arg1: i32) -> (i32, i32, i32, i32) {
    %c0_i32 = arith.constant 0 : i32
    %c0_i32_0 = arith.constant 0 : i32
    %c0_i32_1 = arith.constant 0 : i32
    return %arg1, %arg0, %c0_i32, %c0_i32_0 : i32, i32, i32, i32
  }
}

</mosaic_0001>

<llo_original>
// kernel: tpu_custom_call.1
$region0: #{tpu_custom_call.1}
  #allocation0 [shape = 'u32[]', space=smem, size = 0x4, offset = 0x4, fixed_abs, tag = 'smem constant byte address 0x4 - core index']
  #allocation1 [shape = 'u32[144,128]{1,0:T(1,128)}', space=vmem, size = 0x12000, scoped, tag = 'internal scratch']
  #allocation2 [shape = 'f32[8,32]{1,0:T(8,128)}', space=vmem, size = 0x1000, scoped, tag = 'scratch operand']
  %s0 = inlined_call_operand.vmem [shape: f32[2,8,32], index: 0, kind: input, shape index: {}]
  %s1 = inlined_call_operand.vmem [shape: f32[2,4,1,8], index: 1, kind: input, shape index: {}]
  %s2 = inlined_call_operand.vmem [shape: bf16[2,4,32,24], index: 2, kind: input, shape index: {}]
  %s3 = inlined_call_operand.vmem [shape: f32[2,4,1,24], index: 3, kind: input, shape index: {}]
  %s4 = inlined_call_operand.vmem [shape: bf16[2,4,8,32], index: 4, kind: input, shape index: {}]
  %s5 = inlined_call_operand.vmem [shape: f32[2,1,32], index: 5, kind: input, shape index: {}]
  %s6 = inlined_call_operand.vmem [shape: f32[2,1,32], index: 6, kind: input, shape index: {}]
  %s7 = inlined_call_operand.vmem [shape: f32[2,1,32], index: 7, kind: input, shape index: {}]
  %s8 = inlined_call_operand.vmem [shape: bf16[2,32,128], index: 8, kind: input, shape index: {}]
  %s9 = inlined_call_operand.vmem [shape: f32[2,1,128], index: 9, kind: input, shape index: {}]
  %s10 = inlined_call_operand.vmem [shape: bf16[2,128,32], index: 10, kind: input, shape index: {}]
  %s11 = inlined_call_operand.vmem [shape: f32[2,1,32], index: 11, kind: input, shape index: {}]
  %s12 = inlined_call_operand.vmem [shape: f32[2,1,32], index: 12, kind: input, shape index: {}]
  %s13 = inlined_call_operand.vmem [shape: f32[2,1,32], index: 13, kind: input, shape index: {}]
  %s14 = inlined_call_operand.hbm [shape: f32[2,2,2,128], index: 14, kind: output, shape index: {}]
  %s15 = sld [smem:[#allocation0]]
  $region93: #{tpu_custom_call.1} parent=0
    _
  %s17 = ssub.s32 1, %s15
  %s18 = scalar_select 0, %s17, %s15
  $region1: #{tpu_custom_call.1} parent=0
    #allocation3 [shape = 'u8[2048]{0}', space=vmem, size = 0x800, scoped, tag = 'output window, operand 0']
    #allocation4 [shape = 's32[2]{0}', space=sflag, size = 0x8, scoped, tag = 'scoped memory for tpu_custom_call.1']
    %19 = vsyncpa [#allocation4], 0
    %s20 = scalar_lea.sflag [#allocation4], 1
    %21 = vsyncpa %s20, 0
    loop: start=0, step=1, limit=6
    $region2: #{tpu_custom_call.1} parent=1 // loop_pre_header
      _
    $region3: #{tpu_custom_call.1} parent=1 // loop_header
      %s23 = sphi 0, %s27
      %p24 = scmp.ge.s32.totalorder %s23, 6
      %s30 = sphi 0, %s42
      %s31 = sphi 0, %s38
      %s32 = sphi 0, %s30
      %s33 = sphi 0, %s31
      %s34 = sphi 0, %s32
      %s35 = sphi 0, %s33
      %s45 = sphi 0, %s47
      %s48 = sphi 0, %s45
      %s49 = sphi 0, %s48
      %s65 = sphi 0, %s49
      %s71 = sphi 0, %s73
      %s74 = sphi 0, %s71
      %s75 = sphi 0, %s74
      %s91 = sphi 0, %s75
      %s97 = sphi 0, %s99
      %s100 = sphi 0, %s97
      %s101 = sphi 0, %s100
      %s117 = sphi 0, %s101
      %s123 = sphi 0, %s125
      %s126 = sphi 0, %s123
      %s127 = sphi 0, %s126
      %s143 = sphi 0, %s127
      %s149 = sphi 0, %s151
      %s152 = sphi 0, %s149
      %s153 = sphi 0, %s152
      %s169 = sphi 0, %s153
      %s175 = sphi 0, %s177
      %s178 = sphi 0, %s175
      %s179 = sphi 0, %s178
      %s195 = sphi 0, %s179
      %s201 = sphi 0, %s203
      %s204 = sphi 0, %s201
      %s205 = sphi 0, %s204
      %s221 = sphi 0, %s205
      %s227 = sphi 0, %s229
      %s230 = sphi 0, %s227
      %s231 = sphi 0, %s230
      %s247 = sphi 0, %s231
      %s253 = sphi 0, %s255
      %s256 = sphi 0, %s253
      %s257 = sphi 0, %s256
      %s273 = sphi 0, %s257
      %s279 = sphi 0, %s281
      %s282 = sphi 0, %s279
      %s283 = sphi 0, %s282
      %s299 = sphi 0, %s283
      %s305 = sphi 0, %s307
      %s308 = sphi 0, %s305
      %s309 = sphi 0, %s308
      %s325 = sphi 0, %s309
      %s331 = sphi 0, %s333
      %s334 = sphi 0, %s331
      %s335 = sphi 0, %s334
      %s351 = sphi 0, %s335
      %s357 = sphi 0, %s359
      %s360 = sphi 0, %s357
      %s361 = sphi 0, %s360
      %s377 = sphi 0, %s361
      %s383 = sphi 0, %s385
      %s386 = sphi 0, %s383
      %s387 = sphi 0, %s386
      %s403 = sphi 0, %s387
      %s411 = sphi 0, %s413
      %s414 = sphi 0, %s411
      %s415 = sphi 0, %s414
      %s431 = sphi 0, %s415
    $region4: #{tpu_custom_call.1} parent=1 // loop_header_branch
      %26 = sbr.rel (%p24) target = $region8
    $region5: #{tpu_custom_call.1} parent=1 // loop_body
      %s28 = ssub.s32 %s23, 1
      %s29 = ssub.s32 %s23, 2
      %s36 = sadd.s32 1, %s31
      %p37 = scmp.ge.s32.totalorder %s36, 2
      %s38 = scalar_select %p37, 0, %s36
      %s39 = sadd.s32 1, %s30
      %s40 = scalar_select %p37, %s39, %s30
      %p41 = scmp.ge.s32.totalorder %s40, 2
      %s42 = scalar_select %p41, 0, %s40
      %s43 = ssub.s32 %s30, %s42
      %p44 = scmp.eq.s32.totalorder %s43, 0
      %s46 = sadd.s32 %s45, 1
      %s47 = scalar_select %p44, %s45, %s46
      %p50 = pneg %p44
      %p51 = scmp.eq.s32.totalorder %s23, 3
      %p52 = por %p50, %p51
      %p53 = scmp.ne.s32.totalorder %s45, %s48
      %p54 = scmp.eq.s32.totalorder %s23, 0
      %p55 = por %p53, %p54
      %p56 = scmp.ne.s32.totalorder %s45, %s48
      %p57 = scmp.eq.s32.totalorder %s28, 3
      %p58 = por %p56, %p57
      %p59 = scmp.ne.s32.totalorder %s48, %s49
      %p60 = scmp.eq.s32.totalorder %s28, 0
      %p61 = por %p59, %p60
      %p62 = scmp.ne.s32.totalorder %s48, %s49
      %p63 = scmp.eq.s32.totalorder %s29, 3
      %p64 = por %p62, %p63
      %p66 = scmp.ne.s32.totalorder %s49, %s65
      %p67 = scmp.eq.s32.totalorder %s29, 0
      %p68 = por %p66, %p67
      %s69 = ssub.s32 %s30, %s42
      %p70 = scmp.eq.s32.totalorder %s69, 0
      %s72 = sadd.s32 %s71, 1
      %s73 = scalar_select %p70, %s71, %s72
      %p76 = pneg %p70
      %p77 = scmp.eq.s32.totalorder %s23, 3
      %p78 = por %p76, %p77
      %p79 = scmp.ne.s32.totalorder %s71, %s74
      %p80 = scmp.eq.s32.totalorder %s23, 0
      %p81 = por %p79, %p80
      %p82 = scmp.ne.s32.totalorder %s71, %s74
      %p83 = scmp.eq.s32.totalorder %s28, 3
      %p84 = por %p82, %p83
      %p85 = scmp.ne.s32.totalorder %s74, %s75
      %p86 = scmp.eq.s32.totalorder %s28, 0
      %p87 = por %p85, %p86
      %p88 = scmp.ne.s32.totalorder %s74, %s75
      %p89 = scmp.eq.s32.totalorder %s29, 3
      %p90 = por %p88, %p89
      %p92 = scmp.ne.s32.totalorder %s75, %s91
      %p93 = scmp.eq.s32.totalorder %s29, 0
      %p94 = por %p92, %p93
      %s95 = ssub.s32 %s31, %s38
      %p96 = scmp.eq.s32.totalorder %s95, 0
      %s98 = sadd.s32 %s97, 1
      %s99 = scalar_select %p96, %s97, %s98
      %p102 = pneg %p96
      %p103 = scmp.eq.s32.totalorder %s23, 3
      %p104 = por %p102, %p103
      %p105 = scmp.ne.s32.totalorder %s97, %s100
      %p106 = scmp.eq.s32.totalorder %s23, 0
      %p107 = por %p105, %p106
      %p108 = scmp.ne.s32.totalorder %s97, %s100
      %p109 = scmp.eq.s32.totalorder %s28, 3
      %p110 = por %p108, %p109
      %p111 = scmp.ne.s32.totalorder %s100, %s101
      %p112 = scmp.eq.s32.totalorder %s28, 0
      %p113 = por %p111, %p112
      %p114 = scmp.ne.s32.totalorder %s100, %s101
      %p115 = scmp.eq.s32.totalorder %s29, 3
      %p116 = por %p114, %p115
      %p118 = scmp.ne.s32.totalorder %s101, %s117
      %p119 = scmp.eq.s32.totalorder %s29, 0
      %p120 = por %p118, %p119
      %s121 = ssub.s32 %s31, %s38
      %p122 = scmp.eq.s32.totalorder %s121, 0
      %s124 = sadd.s32 %s123, 1
      %s125 = scalar_select %p122, %s123, %s124
      %p128 = pneg %p122
      %p129 = scmp.eq.s32.totalorder %s23, 3
      %p130 = por %p128, %p129
      %p131 = scmp.ne.s32.totalorder %s123, %s126
      %p132 = scmp.eq.s32.totalorder %s23, 0
      %p133 = por %p131, %p132
      %p134 = scmp.ne.s32.totalorder %s123, %s126
      %p135 = scmp.eq.s32.totalorder %s28, 3
      %p136 = por %p134, %p135
      %p137 = scmp.ne.s32.totalorder %s126, %s127
      %p138 = scmp.eq.s32.totalorder %s28, 0
      %p139 = por %p137, %p138
      %p140 = scmp.ne.s32.totalorder %s126, %s127
      %p141 = scmp.eq.s32.totalorder %s29, 3
      %p142 = por %p140, %p141
      %p144 = scmp.ne.s32.totalorder %s127, %s143
      %p145 = scmp.eq.s32.totalorder %s29, 0
      %p146 = por %p144, %p145
      %s147 = ssub.s32 %s31, %s38
      %p148 = scmp.eq.s32.totalorder %s147, 0
      %s150 = sadd.s32 %s149, 1
      %s151 = scalar_select %p148, %s149, %s150
      %p154 = pneg %p148
      %p155 = scmp.eq.s32.totalorder %s23, 3
      %p156 = por %p154, %p155
      %p157 = scmp.ne.s32.totalorder %s149, %s152
      %p158 = scmp.eq.s32.totalorder %s23, 0
      %p159 = por %p157, %p158
      %p160 = scmp.ne.s32.totalorder %s149, %s152
      %p161 = scmp.eq.s32.totalorder %s28, 3
      %p162 = por %p160, %p161
      %p163 = scmp.ne.s32.totalorder %s152, %s153
      %p164 = scmp.eq.s32.totalorder %s28, 0
      %p165 = por %p163, %p164
      %p166 = scmp.ne.s32.totalorder %s152, %s153
      %p167 = scmp.eq.s32.totalorder %s29, 3
      %p168 = por %p166, %p167
      %p170 = scmp.ne.s32.totalorder %s153, %s169
      %p171 = scmp.eq.s32.totalorder %s29, 0
      %p172 = por %p170, %p171
      %s173 = ssub.s32 %s31, %s38
      %p174 = scmp.eq.s32.totalorder %s173, 0
      %s176 = sadd.s32 %s175, 1
      %s177 = scalar_select %p174, %s175, %s176
      %p180 = pneg %p174
      %p181 = scmp.eq.s32.totalorder %s23, 3
      %p182 = por %p180, %p181
      %p183 = scmp.ne.s32.totalorder %s175, %s178
      %p184 = scmp.eq.s32.totalorder %s23, 0
      %p185 = por %p183, %p184
      %p186 = scmp.ne.s32.totalorder %s175, %s178
      %p187 = scmp.eq.s32.totalorder %s28, 3
      %p188 = por %p186, %p187
      %p189 = scmp.ne.s32.totalorder %s178, %s179
      %p190 = scmp.eq.s32.totalorder %s28, 0
      %p191 = por %p189, %p190
      %p192 = scmp.ne.s32.totalorder %s178, %s179
      %p193 = scmp.eq.s32.totalorder %s29, 3
      %p194 = por %p192, %p193
      %p196 = scmp.ne.s32.totalorder %s179, %s195
      %p197 = scmp.eq.s32.totalorder %s29, 0
      %p198 = por %p196, %p197
      %s199 = ssub.s32 %s31, %s38
      %p200 = scmp.eq.s32.totalorder %s199, 0
      %s202 = sadd.s32 %s201, 1
      %s203 = scalar_select %p200, %s201, %s202
      %p206 = pneg %p200
      %p207 = scmp.eq.s32.totalorder %s23, 3
      %p208 = por %p206, %p207
      %p209 = scmp.ne.s32.totalorder %s201, %s204
      %p210 = scmp.eq.s32.totalorder %s23, 0
      %p211 = por %p209, %p210
      %p212 = scmp.ne.s32.totalorder %s201, %s204
      %p213 = scmp.eq.s32.totalorder %s28, 3
      %p214 = por %p212, %p213
      %p215 = scmp.ne.s32.totalorder %s204, %s205
      %p216 = scmp.eq.s32.totalorder %s28, 0
      %p217 = por %p215, %p216
      %p218 = scmp.ne.s32.totalorder %s204, %s205
      %p219 = scmp.eq.s32.totalorder %s29, 3
      %p220 = por %p218, %p219
      %p222 = scmp.ne.s32.totalorder %s205, %s221
      %p223 = scmp.eq.s32.totalorder %s29, 0
      %p224 = por %p222, %p223
      %s225 = ssub.s32 %s31, %s38
      %p226 = scmp.eq.s32.totalorder %s225, 0
      %s228 = sadd.s32 %s227, 1
      %s229 = scalar_select %p226, %s227, %s228
      %p232 = pneg %p226
      %p233 = scmp.eq.s32.totalorder %s23, 3
      %p234 = por %p232, %p233
      %p235 = scmp.ne.s32.totalorder %s227, %s230
      %p236 = scmp.eq.s32.totalorder %s23, 0
      %p237 = por %p235, %p236
      %p238 = scmp.ne.s32.totalorder %s227, %s230
      %p239 = scmp.eq.s32.totalorder %s28, 3
      %p240 = por %p238, %p239
      %p241 = scmp.ne.s32.totalorder %s230, %s231
      %p242 = scmp.eq.s32.totalorder %s28, 0
      %p243 = por %p241, %p242
      %p244 = scmp.ne.s32.totalorder %s230, %s231
      %p245 = scmp.eq.s32.totalorder %s29, 3
      %p246 = por %p244, %p245
      %p248 = scmp.ne.s32.totalorder %s231, %s247
      %p249 = scmp.eq.s32.totalorder %s29, 0
      %p250 = por %p248, %p249
      %s251 = ssub.s32 %s31, %s38
      %p252 = scmp.eq.s32.totalorder %s251, 0
      %s254 = sadd.s32 %s253, 1
      %s255 = scalar_select %p252, %s253, %s254
      %p258 = pneg %p252
      %p259 = scmp.eq.s32.totalorder %s23, 3
      %p260 = por %p258, %p259
      %p261 = scmp.ne.s32.totalorder %s253, %s256
      %p262 = scmp.eq.s32.totalorder %s23, 0
      %p263 = por %p261, %p262
      %p264 = scmp.ne.s32.totalorder %s253, %s256
      %p265 = scmp.eq.s32.totalorder %s28, 3
      %p266 = por %p264, %p265
      %p267 = scmp.ne.s32.totalorder %s256, %s257
      %p268 = scmp.eq.s32.totalorder %s28, 0
      %p269 = por %p267, %p268
      %p270 = scmp.ne.s32.totalorder %s256, %s257
      %p271 = scmp.eq.s32.totalorder %s29, 3
      %p272 = por %p270, %p271
      %p274 = scmp.ne.s32.totalorder %s257, %s273
      %p275 = scmp.eq.s32.totalorder %s29, 0
      %p276 = por %p274, %p275
      %s277 = ssub.s32 %s31, %s38
      %p278 = scmp.eq.s32.totalorder %s277, 0
      %s280 = sadd.s32 %s279, 1
      %s281 = scalar_select %p278, %s279, %s280
      %p284 = pneg %p278
      %p285 = scmp.eq.s32.totalorder %s23, 3
      %p286 = por %p284, %p285
      %p287 = scmp.ne.s32.totalorder %s279, %s282
      %p288 = scmp.eq.s32.totalorder %s23, 0
      %p289 = por %p287, %p288
      %p290 = scmp.ne.s32.totalorder %s279, %s282
      %p291 = scmp.eq.s32.totalorder %s28, 3
      %p292 = por %p290, %p291
      %p293 = scmp.ne.s32.totalorder %s282, %s283
      %p294 = scmp.eq.s32.totalorder %s28, 0
      %p295 = por %p293, %p294
      %p296 = scmp.ne.s32.totalorder %s282, %s283
      %p297 = scmp.eq.s32.totalorder %s29, 3
      %p298 = por %p296, %p297
      %p300 = scmp.ne.s32.totalorder %s283, %s299
      %p301 = scmp.eq.s32.totalorder %s29, 0
      %p302 = por %p300, %p301
      %s303 = ssub.s32 %s31, %s38
      %p304 = scmp.eq.s32.totalorder %s303, 0
      %s306 = sadd.s32 %s305, 1
      %s307 = scalar_select %p304, %s305, %s306
      %p310 = pneg %p304
      %p311 = scmp.eq.s32.totalorder %s23, 3
      %p312 = por %p310, %p311
      %p313 = scmp.ne.s32.totalorder %s305, %s308
      %p314 = scmp.eq.s32.totalorder %s23, 0
      %p315 = por %p313, %p314
      %p316 = scmp.ne.s32.totalorder %s305, %s308
      %p317 = scmp.eq.s32.totalorder %s28, 3
      %p318 = por %p316, %p317
      %p319 = scmp.ne.s32.totalorder %s308, %s309
      %p320 = scmp.eq.s32.totalorder %s28, 0
      %p321 = por %p319, %p320
      %p322 = scmp.ne.s32.totalorder %s308, %s309
      %p323 = scmp.eq.s32.totalorder %s29, 3
      %p324 = por %p322, %p323
      %p326 = scmp.ne.s32.totalorder %s309, %s325
      %p327 = scmp.eq.s32.totalorder %s29, 0
      %p328 = por %p326, %p327
      %s329 = ssub.s32 %s31, %s38
      %p330 = scmp.eq.s32.totalorder %s329, 0
      %s332 = sadd.s32 %s331, 1
      %s333 = scalar_select %p330, %s331, %s332
      %p336 = pneg %p330
      %p337 = scmp.eq.s32.totalorder %s23, 3
      %p338 = por %p336, %p337
      %p339 = scmp.ne.s32.totalorder %s331, %s334
      %p340 = scmp.eq.s32.totalorder %s23, 0
      %p341 = por %p339, %p340
      %p342 = scmp.ne.s32.totalorder %s331, %s334
      %p343 = scmp.eq.s32.totalorder %s28, 3
      %p344 = por %p342, %p343
      %p345 = scmp.ne.s32.totalorder %s334, %s335
      %p346 = scmp.eq.s32.totalorder %s28, 0
      %p347 = por %p345, %p346
      %p348 = scmp.ne.s32.totalorder %s334, %s335
      %p349 = scmp.eq.s32.totalorder %s29, 3
      %p350 = por %p348, %p349
      %p352 = scmp.ne.s32.totalorder %s335, %s351
      %p353 = scmp.eq.s32.totalorder %s29, 0
      %p354 = por %p352, %p353
      %s355 = ssub.s32 %s31, %s38
      %p356 = scmp.eq.s32.totalorder %s355, 0
      %s358 = sadd.s32 %s357, 1
      %s359 = scalar_select %p356, %s357, %s358
      %p362 = pneg %p356
      %p363 = scmp.eq.s32.totalorder %s23, 3
      %p364 = por %p362, %p363
      %p365 = scmp.ne.s32.totalorder %s357, %s360
      %p366 = scmp.eq.s32.totalorder %s23, 0
      %p367 = por %p365, %p366
      %p368 = scmp.ne.s32.totalorder %s357, %s360
      %p369 = scmp.eq.s32.totalorder %s28, 3
      %p370 = por %p368, %p369
      %p371 = scmp.ne.s32.totalorder %s360, %s361
      %p372 = scmp.eq.s32.totalorder %s28, 0
      %p373 = por %p371, %p372
      %p374 = scmp.ne.s32.totalorder %s360, %s361
      %p375 = scmp.eq.s32.totalorder %s29, 3
      %p376 = por %p374, %p375
      %p378 = scmp.ne.s32.totalorder %s361, %s377
      %p379 = scmp.eq.s32.totalorder %s29, 0
      %p380 = por %p378, %p379
      %s381 = ssub.s32 %s31, %s38
      %p382 = scmp.eq.s32.totalorder %s381, 0
      %s384 = sadd.s32 %s383, 1
      %s385 = scalar_select %p382, %s383, %s384
      %p388 = pneg %p382
      %p389 = scmp.eq.s32.totalorder %s23, 3
      %p390 = por %p388, %p389
      %p391 = scmp.ne.s32.totalorder %s383, %s386
      %p392 = scmp.eq.s32.totalorder %s23, 0
      %p393 = por %p391, %p392
      %p394 = scmp.ne.s32.totalorder %s383, %s386
      %p395 = scmp.eq.s32.totalorder %s28, 3
      %p396 = por %p394, %p395
      %p397 = scmp.ne.s32.totalorder %s386, %s387
      %p398 = scmp.eq.s32.totalorder %s28, 0
      %p399 = por %p397, %p398
      %p400 = scmp.ne.s32.totalorder %s386, %s387
      %p401 = scmp.eq.s32.totalorder %s29, 3
      %p402 = por %p400, %p401
      %p404 = scmp.ne.s32.totalorder %s387, %s403
      %p405 = scmp.eq.s32.totalorder %s29, 0
      %p406 = por %p404, %p405
      %s407 = ssub.s32 %s31, %s38
      %s408 = ssub.s32 %s30, %s42
      %s409 = sor.u32 %s407, %s408
      %p410 = scmp.eq.s32.totalorder %s409, 0
      %s412 = sadd.s32 %s411, 1
      %s413 = scalar_select %p410, %s411, %s412
      %p416 = pneg %p410
      %p417 = scmp.eq.s32.totalorder %s23, 3
      %p418 = por %p416, %p417
      %p419 = scmp.ne.s32.totalorder %s411, %s414
      %p420 = scmp.eq.s32.totalorder %s23, 0
      %p421 = por %p419, %p420
      %p422 = scmp.ne.s32.totalorder %s411, %s414
      %p423 = scmp.eq.s32.totalorder %s28, 3
      %p424 = por %p422, %p423
      %p425 = scmp.ne.s32.totalorder %s414, %s415
      %p426 = scmp.eq.s32.totalorder %s28, 0
      %p427 = por %p425, %p426
      %p428 = scmp.ne.s32.totalorder %s414, %s415
      %p429 = scmp.eq.s32.totalorder %s29, 3
      %p430 = por %p428, %p429
      %p432 = scmp.ne.s32.totalorder %s415, %s431
      %p433 = scmp.eq.s32.totalorder %s29, 0
      %p434 = por %p432, %p433
      %p435 = scmp.le.s32.totalorder 1, %s23
      %p436 = scmp.lt.s32.totalorder %s23, 5
      %p437 = pnand %p435, %p436
      %p438 = pneg %p437
      // Predicated region
      $region9: #{tpu_custom_call.1} parent=5 // pred_check
        _
      $region10: #{tpu_custom_call.1} parent=5 // pred_check_branch
        %440 = sbr.rel (%p437) target = $region12
      $region11: #{tpu_custom_call.1} parent=5 // pred_region
        %s441 = ssub.s32 %s23, 1
      $region12: #{tpu_custom_call.1} parent=5 // pred_fallthru
        _
      %p442 = scmp.lt.s32.totalorder %s23, 4
      // Predicated region
      $region13: #{tpu_custom_call.1} parent=5 // pred_check
        %p443 = pneg %p442
      $region14: #{tpu_custom_call.1} parent=5 // pred_check_branch
        %445 = sbr.rel (%p443) target = $region16
      $region15: #{tpu_custom_call.1} parent=5 // pred_region
        // Predicated region
        $region17: #{tpu_custom_call.1} parent=15 // pred_check
          %p446 = pneg %p55
        $region18: #{tpu_custom_call.1} parent=15 // pred_check_branch
          %448 = sbr.rel (%p446) target = $region20
        $region19: #{tpu_custom_call.1} parent=15 // pred_region
          %p449 = scmp.lt.s32.totalorder %s30, 1
          %s450 = scalar_select %p449, %s30, 1
          %s451 = smul.addr %s450, 8
          %s452 = scalar_lea.vmem %s0, %s451
        $region20: #{tpu_custom_call.1} parent=15 // pred_fallthru
          _
        // Predicated region
        $region21: #{tpu_custom_call.1} parent=15 // pred_check
          %p453 = pneg %p81
        $region22: #{tpu_custom_call.1} parent=15 // pred_check_branch
          %455 = sbr.rel (%p453) target = $region24
        $region23: #{tpu_custom_call.1} parent=15 // pred_region
          %p456 = scmp.lt.s32.totalorder %s30, 1
          %s457 = scalar_select %p456, %s30, 1
          %s458 = smul.addr %s457, 4
          %s459 = scalar_lea.vmem %s1, %s458
        $region24: #{tpu_custom_call.1} parent=15 // pred_fallthru
          _
        // Predicated region
        $region25: #{tpu_custom_call.1} parent=15 // pred_check
          %p460 = pneg %p107
        $region26: #{tpu_custom_call.1} parent=15 // pred_check_branch
          %462 = sbr.rel (%p460) target = $region28
        $region27: #{tpu_custom_call.1} parent=15 // pred_region
          %p463 = scmp.lt.s32.totalorder %s31, 1
          %s464 = scalar_select %p463, %s31, 1
          %s465 = smul.addr %s464, 16
          %s466 = smul.addr %s465, 4
          %s467 = scalar_lea.vmem %s2, %s466
        $region28: #{tpu_custom_call.1} parent=15 // pred_fallthru
          _
        // Predicated region
        $region29: #{tpu_custom_call.1} parent=15 // pred_check
          %p468 = pneg %p133
        $region30: #{tpu_custom_call.1} parent=15 // pred_check_branch
          %470 = sbr.rel (%p468) target = $region32
        $region31: #{tpu_custom_call.1} parent=15 // pred_region
          %p471 = scmp.lt.s32.totalorder %s31, 1
          %s472 = scalar_select %p471, %s31, 1
          %s473 = smul.addr %s472, 4
          %s474 = scalar_lea.vmem %s3, %s473
        $region32: #{tpu_custom_call.1} parent=15 // pred_fallthru
          _
        // Predicated region
        $region33: #{tpu_custom_call.1} parent=15 // pred_check
          %p475 = pneg %p159
        $region34: #{tpu_custom_call.1} parent=15 // pred_check_branch
          %477 = sbr.rel (%p475) target = $region36
        $region35: #{tpu_custom_call.1} parent=15 // pred_region
          %p478 = scmp.lt.s32.totalorder %s31, 1
          %s479 = scalar_select %p478, %s31, 1
          %s480 = smul.addr %s479, 4
          %s481 = smul.addr %s480, 4
          %s482 = scalar_lea.vmem %s4, %s481
        $region36: #{tpu_custom_call.1} parent=15 // pred_fallthru
          _
        // Predicated region
        $region37: #{tpu_custom_call.1} parent=15 // pred_check
          %p483 = pneg %p185
        $region38: #{tpu_custom_call.1} parent=15 // pred_check_branch
          %485 = sbr.rel (%p483) target = $region40
        $region39: #{tpu_custom_call.1} parent=15 // pred_region
          %p486 = scmp.lt.s32.totalorder %s31, 1
          %s487 = scalar_select %p486, %s31, 1
          %s488 = scalar_lea.vmem %s5, %s487
        $region40: #{tpu_custom_call.1} parent=15 // pred_fallthru
          _
        // Predicated region
        $region41: #{tpu_custom_call.1} parent=15 // pred_check
          %p489 = pneg %p211
        $region42: #{tpu_custom_call.1} parent=15 // pred_check_branch
          %491 = sbr.rel (%p489) target = $region44
        $region43: #{tpu_custom_call.1} parent=15 // pred_region
          %p492 = scmp.lt.s32.totalorder %s31, 1
          %s493 = scalar_select %p492, %s31, 1
          %s494 = scalar_lea.vmem %s6, %s493
        $region44: #{tpu_custom_call.1} parent=15 // pred_fallthru
          _
        // Predicated region
        $region45: #{tpu_custom_call.1} parent=15 // pred_check
          %p495 = pneg %p237
        $region46: #{tpu_custom_call.1} parent=15 // pred_check_branch
          %497 = sbr.rel (%p495) target = $region48
        $region47: #{tpu_custom_call.1} parent=15 // pred_region
          %p498 = scmp.lt.s32.totalorder %s31, 1
          %s499 = scalar_select %p498, %s31, 1
          %s500 = scalar_lea.vmem %s7, %s499
        $region48: #{tpu_custom_call.1} parent=15 // pred_fallthru
          _
        // Predicated region
        $region49: #{tpu_custom_call.1} parent=15 // pred_check
          %p501 = pneg %p263
        $region50: #{tpu_custom_call.1} parent=15 // pred_check_branch
          %503 = sbr.rel (%p501) target = $region52
        $region51: #{tpu_custom_call.1} parent=15 // pred_region
          %p504 = scmp.lt.s32.totalorder %s31, 1
          %s505 = scalar_select %p504, %s31, 1
          %s506 = smul.addr %s505, 4
          %s507 = smul.addr %s506, 4
          %s508 = scalar_lea.vmem %s8, %s507
        $region52: #{tpu_custom_call.1} parent=15 // pred_fallthru
          _
        // Predicated region
        $region53: #{tpu_custom_call.1} parent=15 // pred_check
          %p509 = pneg %p289
        $region54: #{tpu_custom_call.1} parent=15 // pred_check_branch
          %511 = sbr.rel (%p509) target = $region56
        $region55: #{tpu_custom_call.1} parent=15 // pred_region
          %p512 = scmp.lt.s32.totalorder %s31, 1
          %s513 = scalar_select %p512, %s31, 1
          %s514 = scalar_lea.vmem %s9, %s513
        $region56: #{tpu_custom_call.1} parent=15 // pred_fallthru
          _
        // Predicated region
        $region57: #{tpu_custom_call.1} parent=15 // pred_check
          %p515 = pneg %p315
        $region58: #{tpu_custom_call.1} parent=15 // pred_check_branch
          %517 = sbr.rel (%p515) target = $region60
        $region59: #{tpu_custom_call.1} parent=15 // pred_region
          %p518 = scmp.lt.s32.totalorder %s31, 1
          %s519 = scalar_select %p518, %s31, 1
          %s520 = smul.addr %s519, 16
          %s521 = smul.addr %s520, 4
          %s522 = scalar_lea.vmem %s10, %s521
        $region60: #{tpu_custom_call.1} parent=15 // pred_fallthru
          _
        // Predicated region
        $region61: #{tpu_custom_call.1} parent=15 // pred_check
          %p523 = pneg %p341
        $region62: #{tpu_custom_call.1} parent=15 // pred_check_branch
          %525 = sbr.rel (%p523) target = $region64
        $region63: #{tpu_custom_call.1} parent=15 // pred_region
          %p526 = scmp.lt.s32.totalorder %s31, 1
          %s527 = scalar_select %p526, %s31, 1
          %s528 = scalar_lea.vmem %s11, %s527
        $region64: #{tpu_custom_call.1} parent=15 // pred_fallthru
          _
        // Predicated region
        $region65: #{tpu_custom_call.1} parent=15 // pred_check
          %p529 = pneg %p367
        $region66: #{tpu_custom_call.1} parent=15 // pred_check_branch
          %531 = sbr.rel (%p529) target = $region68
        $region67: #{tpu_custom_call.1} parent=15 // pred_region
          %p532 = scmp.lt.s32.totalorder %s31, 1
          %s533 = scalar_select %p532, %s31, 1
          %s534 = scalar_lea.vmem %s12, %s533
        $region68: #{tpu_custom_call.1} parent=15 // pred_fallthru
          _
        // Predicated region
        $region69: #{tpu_custom_call.1} parent=15 // pred_check
          %p535 = pneg %p393
        $region70: #{tpu_custom_call.1} parent=15 // pred_check_branch
          %537 = sbr.rel (%p535) target = $region72
        $region71: #{tpu_custom_call.1} parent=15 // pred_region
          %p538 = scmp.lt.s32.totalorder %s31, 1
          %s539 = scalar_select %p538, %s31, 1
          %s540 = scalar_lea.vmem %s13, %s539
        $region72: #{tpu_custom_call.1} parent=15 // pred_fallthru
          _
      $region16: #{tpu_custom_call.1} parent=5 // pred_fallthru
        _
      %p541 = scmp.le.s32.totalorder 1, %s23
      %p542 = scmp.lt.s32.totalorder %s23, 5
      %p543 = pnand %p541, %p542
      %p544 = pneg %p543
      // Predicated region
      $region73: #{tpu_custom_call.1} parent=5 // pred_check
        _
      $region74: #{tpu_custom_call.1} parent=5 // pred_check_branch
        %546 = sbr.rel (%p543) target = $region76
      $region75: #{tpu_custom_call.1} parent=5 // pred_region
        %s547 = ssub.s32 %s23, 1
        %p548 = scmp.lt.s32.totalorder %s32, 1
        %s549 = scalar_select %p548, %s32, 1
        %s550 = smul.addr %s549, 8
        %s551 = scalar_lea.vmem %s0, %s550
        %p552 = pneg %p61
        %p553 = pneg %p58
        %p554 = scmp.lt.s32.totalorder %s32, 1
        %s555 = scalar_select %p554, %s32, 1
        %s556 = smul.addr %s555, 4
        %s557 = scalar_lea.vmem %s1, %s556
        %p558 = pneg %p87
        %p559 = pneg %p84
        %p560 = scmp.lt.s32.totalorder %s33, 1
        %s561 = scalar_select %p560, %s33, 1
        %s562 = smul.addr %s561, 16
        %s563 = smul.addr %s562, 4
        %s564 = scalar_lea.vmem %s2, %s563
        %p565 = pneg %p113
        %p566 = pneg %p110
        %p567 = scmp.lt.s32.totalorder %s33, 1
        %s568 = scalar_select %p567, %s33, 1
        %s569 = smul.addr %s568, 4
        %s570 = scalar_lea.vmem %s3, %s569
        %p571 = pneg %p139
        %p572 = pneg %p136
        %p573 = scmp.lt.s32.totalorder %s33, 1
        %s574 = scalar_select %p573, %s33, 1
        %s575 = smul.addr %s574, 4
        %s576 = smul.addr %s575, 4
        %s577 = scalar_lea.vmem %s4, %s576
        %p578 = pneg %p165
        %p579 = pneg %p162
        %p580 = scmp.lt.s32.totalorder %s33, 1
        %s581 = scalar_select %p580, %s33, 1
        %s582 = scalar_lea.vmem %s5, %s581
        %p583 = pneg %p191
        %p584 = pneg %p188
        %p585 = scmp.lt.s32.totalorder %s33, 1
        %s586 = scalar_select %p585, %s33, 1
        %s587 = scalar_lea.vmem %s6, %s586
        %p588 = pneg %p217
        %p589 = pneg %p214
        %p590 = scmp.lt.s32.totalorder %s33, 1
        %s591 = scalar_select %p590, %s33, 1
        %s592 = scalar_lea.vmem %s7, %s591
        %p593 = pneg %p243
        %p594 = pneg %p240
        %p595 = scmp.lt.s32.totalorder %s33, 1
        %s596 = scalar_select %p595, %s33, 1
        %s597 = smul.addr %s596, 4
        %s598 = smul.addr %s597, 4
        %s599 = scalar_lea.vmem %s8, %s598
        %p600 = pneg %p269
        %p601 = pneg %p266
        %p602 = scmp.lt.s32.totalorder %s33, 1
        %s603 = scalar_select %p602, %s33, 1
        %s604 = scalar_lea.vmem %s9, %s603
        %p605 = pneg %p295
        %p606 = pneg %p292
        %p607 = scmp.lt.s32.totalorder %s33, 1
        %s608 = scalar_select %p607, %s33, 1
        %s609 = smul.addr %s608, 16
        %s610 = smul.addr %s609, 4
        %s611 = scalar_lea.vmem %s10, %s610
        %p612 = pneg %p321
        %p613 = pneg %p318
        %p614 = scmp.lt.s32.totalorder %s33, 1
        %s615 = scalar_select %p614, %s33, 1
        %s616 = scalar_lea.vmem %s11, %s615
        %p617 = pneg %p347
        %p618 = pneg %p344
        %p619 = scmp.lt.s32.totalorder %s33, 1
        %s620 = scalar_select %p619, %s33, 1
        %s621 = scalar_lea.vmem %s12, %s620
        %p622 = pneg %p373
        %p623 = pneg %p370
        %p624 = scmp.lt.s32.totalorder %s33, 1
        %s625 = scalar_select %p624, %s33, 1
        %s626 = scalar_lea.vmem %s13, %s625
        %p627 = pneg %p399
        %p628 = pneg %p396
        %p629 = pneg %p427
        %p630 = pneg %p424
        %s631 = sand.u32 %s414, 1
        %s632 = scalar_lea.sflag [#allocation4], %s631
        %s633 = sand.u32 %s414, 1
        %s634 = smul.addr %s633, 2
        %s635 = scalar_lea.vmem [#allocation3], %s634
        %p636 = scmp.lt.s32.totalorder %s32, 1
        %s637 = scalar_select %p636, %s32, 1
        %s638 = smul.addr %s637, 8
        %s639 = scalar_lea.vmem %s0, %s638
        %p640 = scmp.lt.s32.totalorder %s32, 1
        %s641 = scalar_select %p640, %s32, 1
        %s642 = smul.addr %s641, 4
        %s643 = scalar_lea.vmem %s1, %s642
        %p644 = scmp.lt.s32.totalorder %s33, 1
        %s645 = scalar_select %p644, %s33, 1
        %s646 = smul.addr %s645, 16
        %s647 = smul.addr %s646, 4
        %s648 = scalar_lea.vmem %s2, %s647
        %p649 = scmp.lt.s32.totalorder %s33, 1
        %s650 = scalar_select %p649, %s33, 1
        %s651 = smul.addr %s650, 4
        %s652 = scalar_lea.vmem %s3, %s651
        %p653 = scmp.lt.s32.totalorder %s33, 1
        %s654 = scalar_select %p653, %s33, 1
        %s655 = smul.addr %s654, 4
        %s656 = smul.addr %s655, 4
        %s657 = scalar_lea.vmem %s4, %s656
        %p658 = scmp.lt.s32.totalorder %s33, 1
        %s659 = scalar_select %p658, %s33, 1
        %s660 = scalar_lea.vmem %s5, %s659
        %p661 = scmp.lt.s32.totalorder %s33, 1
        %s662 = scalar_select %p661, %s33, 1
        %s663 = scalar_lea.vmem %s6, %s662
        %p664 = scmp.lt.s32.totalorder %s33, 1
        %s665 = scalar_select %p664, %s33, 1
        %s666 = scalar_lea.vmem %s7, %s665
        %p667 = scmp.lt.s32.totalorder %s33, 1
        %s668 = scalar_select %p667, %s33, 1
        %s669 = smul.addr %s668, 4
        %s670 = smul.addr %s669, 4
        %s671 = scalar_lea.vmem %s8, %s670
        %p672 = scmp.lt.s32.totalorder %s33, 1
        %s673 = scalar_select %p672, %s33, 1
        %s674 = scalar_lea.vmem %s9, %s673
        %p675 = scmp.lt.s32.totalorder %s33, 1
        %s676 = scalar_select %p675, %s33, 1
        %s677 = smul.addr %s676, 16
        %s678 = smul.addr %s677, 4
        %s679 = scalar_lea.vmem %s10, %s678
        %p680 = scmp.lt.s32.totalorder %s33, 1
        %s681 = scalar_select %p680, %s33, 1
        %s682 = scalar_lea.vmem %s11, %s681
        %p683 = scmp.lt.s32.totalorder %s33, 1
        %s684 = scalar_select %p683, %s33, 1
        %s685 = scalar_lea.vmem %s12, %s684
        %p686 = scmp.lt.s32.totalorder %s33, 1
        %s687 = scalar_select %p686, %s33, 1
        %s688 = scalar_lea.vmem %s13, %s687
        %p690 = scmp.eq.s32.totalorder %s33, 0
        // Predicated region
        $region77: #{tpu_custom_call.1} parent=75 // pred_check
          %p691 = pneg %p690
        $region78: #{tpu_custom_call.1} parent=75 // pred_check_branch
          %693 = sbr.rel (%p691) target = $region80
        $region79: #{tpu_custom_call.1} parent=75 // pred_region
          %v694 = vld [vmem:[%s639] sm:$0xff]
          %vm695 = vcmask 261120
          %696 = vst.msk [vmem:[#allocation2] sm:$0xff] %vm695, %v694
        $region80: #{tpu_custom_call.1} parent=75 // pred_fallthru
          _
        %v697 = vld [vmem:[#allocation2] sm:$0xff]
        %v698 = vpack.c.bf16 %v697, %v697
        %v699 = vld [vmem:[%s648] sm:$0xf]
        %v700 = vld [vmem:[%s648 + $0x4] sm:$0xf]
        %v701 = vld [vmem:[%s648 + $0x8] sm:$0xf]
        %v702 = vld [vmem:[%s648 + $0xc] sm:$0xf]
        %v703 = vld [vmem:[%s648 + $0x10] sm:$0xf]
        %v704 = vld [vmem:[%s648 + $0x14] sm:$0xf]
        %v705 = vld [vmem:[%s648 + $0x18] sm:$0xf]
        %v706 = vld [vmem:[%s648 + $0x1c] sm:$0xf]
        %v707 = vld [vmem:[%s648 + $0x20] sm:$0xf]
        %v708 = vld [vmem:[%s648 + $0x24] sm:$0xf]
        %v709 = vld [vmem:[%s648 + $0x28] sm:$0xf]
        %v710 = vld [vmem:[%s648 + $0x2c] sm:$0xf]
        %v711 = vld [vmem:[%s648 + $0x30] sm:$0xf]
        %v712 = vld [vmem:[%s648 + $0x34] sm:$0xf]
        %v713 = vld [vmem:[%s648 + $0x38] sm:$0xf]
        %v714 = vld [vmem:[%s648 + $0x3c] sm:$0xf]
        %v715 = vld [vmem:[%s652] sm:$0x1]
        %v716 = vld [vmem:[%s652 + $0x1] sm:$0x1]
        %v717 = vld [vmem:[%s652 + $0x2] sm:$0x1]
        %v718 = vld [vmem:[%s652 + $0x3] sm:$0x1]
        %v723 = vlaneseq
        %v724 = vshrl.u32 %v723, 7
        %v725 = vsub.s32 0, %v724
        %v726 = vrot.slane %v715, %v725
        %v727 = vlaneseq
        %v728 = vshrl.u32 %v727, 7
        %v729 = vsub.s32 0, %v728
        %v730 = vrot.slane %v716, %v729
        %v731 = vlaneseq
        %v732 = vshrl.u32 %v731, 7
        %v733 = vsub.s32 0, %v732
        %v734 = vrot.slane %v717, %v733
        %v735 = vlaneseq
        %v736 = vshrl.u32 %v735, 7
        %v737 = vsub.s32 0, %v736
        %v738 = vrot.slane %v718, %v737
        %v747 = vunpack.c.l.b16 %v699
        %v748 = vunpack.c.l.b16 %v700
        %v749 = vunpack.c.l.b16 %v701
        %v750 = vunpack.c.l.b16 %v702
        %v751 = vpack.c.b16 %v748, %v747
        %v752 = vpack.c.b16 %v750, %v749
        %vm755 = vcmask 261120
        %v757 = vsel %vm755, %v698, 0
        %759 = vmatprep.subr.bf16.mxu0 0
        %760 = vmatpush1.bf16.msra.mxu0 %v751
        %761 = vmatprep.subr.bf16.mxu0 0
        %762 = vmatpush1.bf16.msra.mxu0 %v752
        %763 = vmatprep.subr.bf16.mxu0 0
        %764 = vmatpush1.bf16.msra.mxu0 0
        %765 = vmatprep.subr.bf16.mxu0 0
        %766 = vmatpush1.bf16.msra.mxu0 0
        %767 = vmatprep.subr.bf16.mxu0 0
        %768 = vmatpush1.bf16.msra.mxu0 0
        %769 = vmatprep.subr.bf16.mxu0 0
        %770 = vmatpush1.bf16.msra.mxu0 0
        %771 = vmatprep.subr.bf16.mxu0 0
        %772 = vmatpush1.bf16.msra.mxu0 0
        %773 = vmatprep.subr.bf16.mxu0 0
        %774 = vmatpush1.bf16.msra.mxu0 0
        %775 = vmatprep.subr.bf16.mxu0 0
        %776 = vmatpush1.bf16.msra.mxu0 0
        %777 = vmatprep.subr.bf16.mxu0 0
        %778 = vmatpush1.bf16.msra.mxu0 0
        %779 = vmatprep.subr.bf16.mxu0 0
        %780 = vmatpush1.bf16.msra.mxu0 0
        %781 = vmatprep.subr.bf16.mxu0 0
        %782 = vmatpush1.bf16.msra.mxu0 0
        %783 = vmatprep.subr.bf16.mxu0 0
        %784 = vmatpush1.bf16.msra.mxu0 0
        %785 = vmatprep.subr.bf16.mxu0 0
        %786 = vmatpush1.bf16.msra.mxu0 0
        %787 = vmatprep.subr.bf16.mxu0 0
        %788 = vmatpush1.bf16.msra.mxu0 0
        %789 = vmatprep.subr.bf16.mxu0 0
        %790 = vmatpush1.bf16.msra.mxu0 0
        %791 = vmatprep.mubr.bf16.mxu0 0
        %792 = vmatmul.mubr.bf16.gmra.mrb[0].mxu0 %v757
        %v793 = vpop.f32.mrb[0].mxu0
        %v794 = vadd.f32 %v726, %v793
        %v795 = vpop.f32.mrb[0].mxu0
        %v796 = vpop.f32.mrb[0].mxu0
        %v797 = vpop.f32.mrb[0].mxu0
        %798 = vdwg.mxu0
        %v803 = vunpack.c.l.b16 %v703
        %v804 = vunpack.c.l.b16 %v704
        %v805 = vunpack.c.l.b16 %v705
        %v806 = vunpack.c.l.b16 %v706
        %v807 = vpack.c.b16 %v804, %v803
        %v808 = vpack.c.b16 %v806, %v805
        %811 = vmatprep.subr.bf16.mxu0 0
        %812 = vmatpush1.bf16.msra.mxu0 %v807
        %813 = vmatprep.subr.bf16.mxu0 0
        %814 = vmatpush1.bf16.msra.mxu0 %v808
        %815 = vmatprep.subr.bf16.mxu0 0
        %816 = vmatpush1.bf16.msra.mxu0 0
        %817 = vmatprep.subr.bf16.mxu0 0
        %818 = vmatpush1.bf16.msra.mxu0 0
        %819 = vmatprep.subr.bf16.mxu0 0
        %820 = vmatpush1.bf16.msra.mxu0 0
        %821 = vmatprep.subr.bf16.mxu0 0
        %822 = vmatpush1.bf16.msra.mxu0 0
        %823 = vmatprep.subr.bf16.mxu0 0
        %824 = vmatpush1.bf16.msra.mxu0 0
        %825 = vmatprep.subr.bf16.mxu0 0
        %826 = vmatpush1.bf16.msra.mxu0 0
        %827 = vmatprep.subr.bf16.mxu0 0
        %828 = vmatpush1.bf16.msra.mxu0 0
        %829 = vmatprep.subr.bf16.mxu0 0
        %830 = vmatpush1.bf16.msra.mxu0 0
        %831 = vmatprep.subr.bf16.mxu0 0
        %832 = vmatpush1.bf16.msra.mxu0 0
        %833 = vmatprep.subr.bf16.mxu0 0
        %834 = vmatpush1.bf16.msra.mxu0 0
        %835 = vmatprep.subr.bf16.mxu0 0
        %836 = vmatpush1.bf16.msra.mxu0 0
        %837 = vmatprep.subr.bf16.mxu0 0
        %838 = vmatpush1.bf16.msra.mxu0 0
        %839 = vmatprep.subr.bf16.mxu0 0
        %840 = vmatpush1.bf16.msra.mxu0 0
        %841 = vmatprep.subr.bf16.mxu0 0
        %842 = vmatpush1.bf16.msra.mxu0 0
        %843 = vmatprep.mubr.bf16.mxu0 0
        %844 = vmatmul.mubr.bf16.gmra.mrb[0].mxu0 %v757
        %v845 = vpop.f32.mrb[0].mxu0
        %v846 = vadd.f32 %v730, %v845
        %v847 = vpop.f32.mrb[0].mxu0
        %v848 = vpop.f32.mrb[0].mxu0
        %v849 = vpop.f32.mrb[0].mxu0
        %850 = vdwg.mxu0
        %v855 = vunpack.c.l.b16 %v707
        %v856 = vunpack.c.l.b16 %v708
        %v857 = vunpack.c.l.b16 %v709
        %v858 = vunpack.c.l.b16 %v710
        %v859 = vpack.c.b16 %v856, %v855
        %v860 = vpack.c.b16 %v858, %v857
        %863 = vmatprep.subr.bf16.mxu0 0
        %864 = vmatpush1.bf16.msra.mxu0 %v859
        %865 = vmatprep.subr.bf16.mxu0 0
        %866 = vmatpush1.bf16.msra.mxu0 %v860
        %867 = vmatprep.subr.bf16.mxu0 0
        %868 = vmatpush1.bf16.msra.mxu0 0
        %869 = vmatprep.subr.bf16.mxu0 0
        %870 = vmatpush1.bf16.msra.mxu0 0
        %871 = vmatprep.subr.bf16.mxu0 0
        %872 = vmatpush1.bf16.msra.mxu0 0
        %873 = vmatprep.subr.bf16.mxu0 0
        %874 = vmatpush1.bf16.msra.mxu0 0
        %875 = vmatprep.subr.bf16.mxu0 0
        %876 = vmatpush1.bf16.msra.mxu0 0
        %877 = vmatprep.subr.bf16.mxu0 0
        %878 = vmatpush1.bf16.msra.mxu0 0
        %879 = vmatprep.subr.bf16.mxu0 0
        %880 = vmatpush1.bf16.msra.mxu0 0
        %881 = vmatprep.subr.bf16.mxu0 0
        %882 = vmatpush1.bf16.msra.mxu0 0
        %883 = vmatprep.subr.bf16.mxu0 0
        %884 = vmatpush1.bf16.msra.mxu0 0
        %885 = vmatprep.subr.bf16.mxu0 0
        %886 = vmatpush1.bf16.msra.mxu0 0
        %887 = vmatprep.subr.bf16.mxu0 0
        %888 = vmatpush1.bf16.msra.mxu0 0
        %889 = vmatprep.subr.bf16.mxu0 0
        %890 = vmatpush1.bf16.msra.mxu0 0
        %891 = vmatprep.subr.bf16.mxu0 0
        %892 = vmatpush1.bf16.msra.mxu0 0
        %893 = vmatprep.subr.bf16.mxu0 0
        %894 = vmatpush1.bf16.msra.mxu0 0
        %895 = vmatprep.mubr.bf16.mxu0 0
        %896 = vmatmul.mubr.bf16.gmra.mrb[0].mxu0 %v757
        %v897 = vpop.f32.mrb[0].mxu0
        %v898 = vadd.f32 %v734, %v897
        %v899 = vpop.f32.mrb[0].mxu0
        %v900 = vpop.f32.mrb[0].mxu0
        %v901 = vpop.f32.mrb[0].mxu0
        %902 = vdwg.mxu0
        %v907 = vunpack.c.l.b16 %v711
        %v908 = vunpack.c.l.b16 %v712
        %v909 = vunpack.c.l.b16 %v713
        %v910 = vunpack.c.l.b16 %v714
        %v911 = vpack.c.b16 %v908, %v907
        %v912 = vpack.c.b16 %v910, %v909
        %915 = vmatprep.subr.bf16.mxu0 0
        %916 = vmatpush1.bf16.msra.mxu0 %v911
        %917 = vmatprep.subr.bf16.mxu0 0
        %918 = vmatpush1.bf16.msra.mxu0 %v912
        %919 = vmatprep.subr.bf16.mxu0 0
        %920 = vmatpush1.bf16.msra.mxu0 0
        %921 = vmatprep.subr.bf16.mxu0 0
        %922 = vmatpush1.bf16.msra.mxu0 0
        %923 = vmatprep.subr.bf16.mxu0 0
        %924 = vmatpush1.bf16.msra.mxu0 0
        %925 = vmatprep.subr.bf16.mxu0 0
        %926 = vmatpush1.bf16.msra.mxu0 0
        %927 = vmatprep.subr.bf16.mxu0 0
        %928 = vmatpush1.bf16.msra.mxu0 0
        %929 = vmatprep.subr.bf16.mxu0 0
        %930 = vmatpush1.bf16.msra.mxu0 0
        %931 = vmatprep.subr.bf16.mxu0 0
        %932 = vmatpush1.bf16.msra.mxu0 0
        %933 = vmatprep.subr.bf16.mxu0 0
        %934 = vmatpush1.bf16.msra.mxu0 0
        %935 = vmatprep.subr.bf16.mxu0 0
        %936 = vmatpush1.bf16.msra.mxu0 0
        %937 = vmatprep.subr.bf16.mxu0 0
        %938 = vmatpush1.bf16.msra.mxu0 0
        %939 = vmatprep.subr.bf16.mxu0 0
        %940 = vmatpush1.bf16.msra.mxu0 0
        %941 = vmatprep.subr.bf16.mxu0 0
        %942 = vmatpush1.bf16.msra.mxu0 0
        %943 = vmatprep.subr.bf16.mxu0 0
        %944 = vmatpush1.bf16.msra.mxu0 0
        %945 = vmatprep.subr.bf16.mxu0 0
        %946 = vmatpush1.bf16.msra.mxu0 0
        %947 = vmatprep.mubr.bf16.mxu0 0
        %948 = vmatmul.mubr.bf16.gmra.mrb[0].mxu0 %v757
        %v949 = vpop.f32.mrb[0].mxu0
        %v950 = vadd.f32 %v738, %v949
        %v951 = vpop.f32.mrb[0].mxu0
        %v952 = vpop.f32.mrb[0].mxu0
        %v953 = vpop.f32.mrb[0].mxu0
        %954 = vdwg.mxu0
        %v955 = vpack.c.bf16 %v794, %v794
        %v956 = vpack.c.bf16 %v846, %v846
        %v957 = vpack.c.bf16 %v898, %v898
        %v958 = vpack.c.bf16 %v950, %v950
        %960 = vrot.lane.b32.xlu0 %v955, 120
        %v961 = vpop.permute.xlu0 %960
        %vm962 = vcmask 64512
        %v964 = vsel %vm962, %v955, 0
        %v967 = vsel %vm962, %v961, 0
        %969 = vmatprep.subr.bf16.mxu0 0
        %970 = vmatpush1.bf16.xpose.msra.mxu0 %v967
        %971 = vmatprep.subr.bf16.mxu0 0
        %972 = vmatpush1.bf16.xpose.msra.mxu0 0
        %973 = vmatprep.subr.bf16.mxu0 0
        %974 = vmatpush1.bf16.xpose.msra.mxu0 0
        %975 = vmatprep.subr.bf16.mxu0 0
        %976 = vmatpush1.bf16.xpose.msra.mxu0 0
        %977 = vmatprep.subr.bf16.mxu0 0
        %978 = vmatpush1.bf16.xpose.msra.mxu0 0
        %979 = vmatprep.subr.bf16.mxu0 0
        %980 = vmatpush1.bf16.xpose.msra.mxu0 0
        %981 = vmatprep.subr.bf16.mxu0 0
        %982 = vmatpush1.bf16.xpose.msra.mxu0 0
        %983 = vmatprep.subr.bf16.mxu0 0
        %984 = vmatpush1.bf16.xpose.msra.mxu0 0
        %985 = vmatprep.subr.bf16.mxu0 0
        %986 = vmatpush1.bf16.xpose.msra.mxu0 0
        %987 = vmatprep.subr.bf16.mxu0 0
        %988 = vmatpush1.bf16.xpose.msra.mxu0 0
        %989 = vmatprep.subr.bf16.mxu0 0
        %990 = vmatpush1.bf16.xpose.msra.mxu0 0
        %991 = vmatprep.subr.bf16.mxu0 0
        %992 = vmatpush1.bf16.xpose.msra.mxu0 0
        %993 = vmatprep.subr.bf16.mxu0 0
        %994 = vmatpush1.bf16.xpose.msra.mxu0 0
        %995 = vmatprep.subr.bf16.mxu0 0
        %996 = vmatpush1.bf16.xpose.msra.mxu0 0
        %997 = vmatprep.subr.bf16.mxu0 0
        %998 = vmatpush1.bf16.xpose.msra.mxu0 0
        %999 = vmatprep.subr.bf16.mxu0 0
        %1000 = vmatpush1.bf16.xpose.msra.mxu0 0
        %1001 = vmatprep.mubr.bf16.mxu0 0
        %1002 = vmatmul.mubr.bf16.gmra.mrb[0].mxu0 %v964
        %v1003 = vpop.f32.mrb[0].mxu0
        %v1004 = vadd.f32 0.0, %v1003
        %v1005 = vpop.f32.mrb[0].mxu0
        %v1006 = vpop.f32.mrb[0].mxu0
        %v1007 = vpop.f32.mrb[0].mxu0
        %1008 = vdwg.mxu0
        %1010 = vrot.lane.b32.xlu0 %v956, 120
        %v1011 = vpop.permute.xlu0 %1010
        %v1013 = vsel %vm962, %v956, 0
        %v1016 = vsel %vm962, %v1011, 0
        %1018 = vmatprep.subr.bf16.mxu0 0
        %1019 = vmatpush1.bf16.xpose.msra.mxu0 %v1016
        %1020 = vmatprep.subr.bf16.mxu0 0
        %1021 = vmatpush1.bf16.xpose.msra.mxu0 0
        %1022 = vmatprep.subr.bf16.mxu0 0
        %1023 = vmatpush1.bf16.xpose.msra.mxu0 0
        %1024 = vmatprep.subr.bf16.mxu0 0
        %1025 = vmatpush1.bf16.xpose.msra.mxu0 0
        %1026 = vmatprep.subr.bf16.mxu0 0
        %1027 = vmatpush1.bf16.xpose.msra.mxu0 0
        %1028 = vmatprep.subr.bf16.mxu0 0
        %1029 = vmatpush1.bf16.xpose.msra.mxu0 0
        %1030 = vmatprep.subr.bf16.mxu0 0
        %1031 = vmatpush1.bf16.xpose.msra.mxu0 0
        %1032 = vmatprep.subr.bf16.mxu0 0
        %1033 = vmatpush1.bf16.xpose.msra.mxu0 0
        %1034 = vmatprep.subr.bf16.mxu0 0
        %1035 = vmatpush1.bf16.xpose.msra.mxu0 0
        %1036 = vmatprep.subr.bf16.mxu0 0
        %1037 = vmatpush1.bf16.xpose.msra.mxu0 0
        %1038 = vmatprep.subr.bf16.mxu0 0
        %1039 = vmatpush1.bf16.xpose.msra.mxu0 0
        %1040 = vmatprep.subr.bf16.mxu0 0
        %1041 = vmatpush1.bf16.xpose.msra.mxu0 0
        %1042 = vmatprep.subr.bf16.mxu0 0
        %1043 = vmatpush1.bf16.xpose.msra.mxu0 0
        %1044 = vmatprep.subr.bf16.mxu0 0
        %1045 = vmatpush1.bf16.xpose.msra.mxu0 0
        %1046 = vmatprep.subr.bf16.mxu0 0
        %1047 = vmatpush1.bf16.xpose.msra.mxu0 0
        %1048 = vmatprep.subr.bf16.mxu0 0
        %1049 = vmatpush1.bf16.xpose.msra.mxu0 0
        %1050 = vmatprep.mubr.bf16.mxu0 0
        %1051 = vmatmul.mubr.bf16.gmra.mrb[0].mxu0 %v1013
        %v1052 = vpop.f32.mrb[0].mxu0
        %v1053 = vadd.f32 0.0, %v1052
        %v1054 = vpop.f32.mrb[0].mxu0
        %v1055 = vpop.f32.mrb[0].mxu0
        %v1056 = vpop.f32.mrb[0].mxu0
        %1057 = vdwg.mxu0
        %1059 = vrot.lane.b32.xlu0 %v957, 120
        %v1060 = vpop.permute.xlu0 %1059
        %v1062 = vsel %vm962, %v957, 0
        %v1065 = vsel %vm962, %v1060, 0
        %1067 = vmatprep.subr.bf16.mxu0 0
        %1068 = vmatpush1.bf16.xpose.msra.mxu0 %v1065
        %1069 = vmatprep.subr.bf16.mxu0 0
        %1070 = vmatpush1.bf16.xpose.msra.mxu0 0
        %1071 = vmatprep.subr.bf16.mxu0 0
        %1072 = vmatpush1.bf16.xpose.msra.mxu0 0
        %1073 = vmatprep.subr.bf16.mxu0 0
        %1074 = vmatpush1.bf16.xpose.msra.mxu0 0
        %1075 = vmatprep.subr.bf16.mxu0 0
        %1076 = vmatpush1.bf16.xpose.msra.mxu0 0
        %1077 = vmatprep.subr.bf16.mxu0 0
        %1078 = vmatpush1.bf16.xpose.msra.mxu0 0
        %1079 = vmatprep.subr.bf16.mxu0 0
        %1080 = vmatpush1.bf16.xpose.msra.mxu0 0
        %1081 = vmatprep.subr.bf16.mxu0 0
        %1082 = vmatpush1.bf16.xpose.msra.mxu0 0
        %1083 = vmatprep.subr.bf16.mxu0 0
        %1084 = vmatpush1.bf16.xpose.msra.mxu0 0
        %1085 = vmatprep.subr.bf16.mxu0 0
        %1086 = vmatpush1.bf16.xpose.msra.mxu0 0
        %1087 = vmatprep.subr.bf16.mxu0 0
        %1088 = vmatpush1.bf16.xpose.msra.mxu0 0
        %1089 = vmatprep.subr.bf16.mxu0 0
        %1090 = vmatpush1.bf16.xpose.msra.mxu0 0
        %1091 = vmatprep.subr.bf16.mxu0 0
        %1092 = vmatpush1.bf16.xpose.msra.mxu0 0
        %1093 = vmatprep.subr.bf16.mxu0 0
        %1094 = vmatpush1.bf16.xpose.msra.mxu0 0
        %1095 = vmatprep.subr.bf16.mxu0 0
        %1096 = vmatpush1.bf16.xpose.msra.mxu0 0
        %1097 = vmatprep.subr.bf16.mxu0 0
        %1098 = vmatpush1.bf16.xpose.msra.mxu0 0
        %1099 = vmatprep.mubr.bf16.mxu0 0
        %1100 = vmatmul.mubr.bf16.gmra.mrb[0].mxu0 %v1062
        %v1101 = vpop.f32.mrb[0].mxu0
        %v1102 = vadd.f32 0.0, %v1101
        %v1103 = vpop.f32.mrb[0].mxu0
        %v1104 = vpop.f32.mrb[0].mxu0
        %v1105 = vpop.f32.mrb[0].mxu0
        %1106 = vdwg.mxu0
        %1108 = vrot.lane.b32.xlu0 %v958, 120
        %v1109 = vpop.permute.xlu0 %1108
        %v1111 = vsel %vm962, %v958, 0
        %v1114 = vsel %vm962, %v1109, 0
        %1116 = vmatprep.subr.bf16.mxu0 0
        %1117 = vmatpush1.bf16.xpose.msra.mxu0 %v1114
        %1118 = vmatprep.subr.bf16.mxu0 0
        %1119 = vmatpush1.bf16.xpose.msra.mxu0 0
        %1120 = vmatprep.subr.bf16.mxu0 0
        %1121 = vmatpush1.bf16.xpose.msra.mxu0 0
        %1122 = vmatprep.subr.bf16.mxu0 0
        %1123 = vmatpush1.bf16.xpose.msra.mxu0 0
        %1124 = vmatprep.subr.bf16.mxu0 0
        %1125 = vmatpush1.bf16.xpose.msra.mxu0 0
        %1126 = vmatprep.subr.bf16.mxu0 0
        %1127 = vmatpush1.bf16.xpose.msra.mxu0 0
        %1128 = vmatprep.subr.bf16.mxu0 0
        %1129 = vmatpush1.bf16.xpose.msra.mxu0 0
        %1130 = vmatprep.subr.bf16.mxu0 0
        %1131 = vmatpush1.bf16.xpose.msra.mxu0 0
        %1132 = vmatprep.subr.bf16.mxu0 0
        %1133 = vmatpush1.bf16.xpose.msra.mxu0 0
        %1134 = vmatprep.subr.bf16.mxu0 0
        %1135 = vmatpush1.bf16.xpose.msra.mxu0 0
        %1136 = vmatprep.subr.bf16.mxu0 0
        %1137 = vmatpush1.bf16.xpose.msra.mxu0 0
        %1138 = vmatprep.subr.bf16.mxu0 0
        %1139 = vmatpush1.bf16.xpose.msra.mxu0 0
        %1140 = vmatprep.subr.bf16.mxu0 0
        %1141 = vmatpush1.bf16.xpose.msra.mxu0 0
        %1142 = vmatprep.subr.bf16.mxu0 0
        %1143 = vmatpush1.bf16.xpose.msra.mxu0 0
        %1144 = vmatprep.subr.bf16.mxu0 0
        %1145 = vmatpush1.bf16.xpose.msra.mxu0 0
        %1146 = vmatprep.subr.bf16.mxu0 0
        %1147 = vmatpush1.bf16.xpose.msra.mxu0 0
        %1148 = vmatprep.mubr.bf16.mxu0 0
        %1149 = vmatmul.mubr.bf16.gmra.mrb[0].mxu0 %v1111
        %v1150 = vpop.f32.mrb[0].mxu0
        %v1151 = vadd.f32 0.0, %v1150
        %v1152 = vpop.f32.mrb[0].mxu0
        %v1153 = vpop.f32.mrb[0].mxu0
        %v1154 = vpop.f32.mrb[0].mxu0
        %1155 = vdwg.mxu0
        %v1156 = vmul.f32 %v1004, 0.35355338
        %v1157 = vmul.f32 %v1053, 0.35355338
        %v1158 = vmul.f32 %v1102, 0.35355338
        %v1159 = vmul.f32 %v1151, 0.35355338
        %v1160 = vld [vmem:[%s643] sm:$0x1]
        %v1161 = vld [vmem:[%s643 + $0x1] sm:$0x1]
        %v1162 = vld [vmem:[%s643 + $0x2] sm:$0x1]
        %v1163 = vld [vmem:[%s643 + $0x3] sm:$0x1]
        %v1168 = vlaneseq
        %v1169 = vshrl.u32 %v1168, 7
        %v1170 = vsub.s32 0, %v1169
        %v1171 = vrot.slane %v1160, %v1170
        %v1172 = vlaneseq
        %v1173 = vshrl.u32 %v1172, 7
        %v1174 = vsub.s32 0, %v1173
        %v1175 = vrot.slane %v1161, %v1174
        %v1176 = vlaneseq
        %v1177 = vshrl.u32 %v1176, 7
        %v1178 = vsub.s32 0, %v1177
        %v1179 = vrot.slane %v1162, %v1178
        %v1180 = vlaneseq
        %v1181 = vshrl.u32 %v1180, 7
        %v1182 = vsub.s32 0, %v1181
        %v1183 = vrot.slane %v1163, %v1182
        %v1188 = vadd.f32 %v1156, %v1171
        %v1189 = vadd.f32 %v1157, %v1175
        %v1190 = vadd.f32 %v1158, %v1179
        %v1191 = vadd.f32 %v1159, %v1183
        %v1192 = vsel %vm962, %v1188, -inf
        %1193 = vmax.xlane.f32.xlu0 %v1192
        %v1194 = vpop.xlane.xlu0 %1193
        %v1195 = vsel %vm962, %v1189, -inf
        %1196 = vmax.xlane.f32.xlu0 %v1195
        %v1197 = vpop.xlane.xlu0 %1196
        %v1198 = vsel %vm962, %v1190, -inf
        %1199 = vmax.xlane.f32.xlu0 %v1198
        %v1200 = vpop.xlane.xlu0 %1199
        %v1201 = vsel %vm962, %v1191, -inf
        %1202 = vmax.xlane.f32.xlu0 %v1201
        %v1203 = vpop.xlane.xlu0 %1202
        %v1204 = vsub.f32 %v1188, %v1194
        %v1205 = vsub.f32 %v1189, %v1197
        %v1206 = vsub.f32 %v1190, %v1200
        %v1207 = vsub.f32 %v1191, %v1203
        %v1208 = vmul.f32 %v1204, 1.442695
        %v1209 = vpow.pop %v1208
        %v1210 = vmul.f32 %v1205, 1.442695
        %v1211 = vpow.pop %v1210
        %v1212 = vmul.f32 %v1206, 1.442695
        %v1213 = vpow.pop %v1212
        %v1214 = vmul.f32 %v1207, 1.442695
        %v1215 = vpow.pop %v1214
        %v1216 = vsel %vm962, %v1209, 0.0
        %1217 = vadd.xlane.f32.xlu0 %v1216
        %v1218 = vpop.xlane.xlu0 %1217
        %v1219 = vsel %vm962, %v1211, 0.0
        %1220 = vadd.xlane.f32.xlu0 %v1219
        %v1221 = vpop.xlane.xlu0 %1220
        %v1222 = vsel %vm962, %v1213, 0.0
        %1223 = vadd.xlane.f32.xlu0 %v1222
        %v1224 = vpop.xlane.xlu0 %1223
        %v1225 = vsel %vm962, %v1215, 0.0
        %1226 = vadd.xlane.f32.xlu0 %v1225
        %v1227 = vpop.xlane.xlu0 %1226
        %v1228 = vrcp.pop %v1218
        %v1229 = vmul.f32 %v1209, %v1228
        %v1230 = vrcp.pop %v1221
        %v1231 = vmul.f32 %v1211, %v1230
        %v1232 = vrcp.pop %v1224
        %v1233 = vmul.f32 %v1213, %v1232
        %v1234 = vrcp.pop %v1227
        %v1235 = vmul.f32 %v1215, %v1234
        %v1236 = vpack.c.bf16 %v1229, %v1229
        %v1237 = vpack.c.bf16 %v1231, %v1231
        %v1238 = vpack.c.bf16 %v1233, %v1233
        %v1239 = vpack.c.bf16 %v1235, %v1235
        %1240 = vrot.lane.b32.xlu0 %v955, 112
        %v1241 = vpop.permute.xlu0 %1240
        %v1243 = vsel %vm962, %v1236, 0
        %vm1245 = vcmask 1043456
        %v1247 = vsel %vm1245, %v1241, 0
        %1249 = vmatprep.subr.bf16.mxu0 0
        %1250 = vmatpush1.bf16.msra.mxu0 %v1247
        %1251 = vmatprep.subr.bf16.mxu0 0
        %1252 = vmatpush1.bf16.msra.mxu0 0
        %1253 = vmatprep.subr.bf16.mxu0 0
        %1254 = vmatpush1.bf16.msra.mxu0 0
        %1255 = vmatprep.subr.bf16.mxu0 0
        %1256 = vmatpush1.bf16.msra.mxu0 0
        %1257 = vmatprep.subr.bf16.mxu0 0
        %1258 = vmatpush1.bf16.msra.mxu0 0
        %1259 = vmatprep.subr.bf16.mxu0 0
        %1260 = vmatpush1.bf16.msra.mxu0 0
        %1261 = vmatprep.subr.bf16.mxu0 0
        %1262 = vmatpush1.bf16.msra.mxu0 0
        %1263 = vmatprep.subr.bf16.mxu0 0
        %1264 = vmatpush1.bf16.msra.mxu0 0
        %1265 = vmatprep.subr.bf16.mxu0 0
        %1266 = vmatpush1.bf16.msra.mxu0 0
        %1267 = vmatprep.subr.bf16.mxu0 0
        %1268 = vmatpush1.bf16.msra.mxu0 0
        %1269 = vmatprep.subr.bf16.mxu0 0
        %1270 = vmatpush1.bf16.msra.mxu0 0
        %1271 = vmatprep.subr.bf16.mxu0 0
        %1272 = vmatpush1.bf16.msra.mxu0 0
        %1273 = vmatprep.subr.bf16.mxu0 0
        %1274 = vmatpush1.bf16.msra.mxu0 0
        %1275 = vmatprep.subr.bf16.mxu0 0
        %1276 = vmatpush1.bf16.msra.mxu0 0
        %1277 = vmatprep.subr.bf16.mxu0 0
        %1278 = vmatpush1.bf16.msra.mxu0 0
        %1279 = vmatprep.subr.bf16.mxu0 0
        %1280 = vmatpush1.bf16.msra.mxu0 0
        %1281 = vmatprep.mubr.bf16.mxu0 0
        %1282 = vmatmul.mubr.bf16.gmra.mrb[0].mxu0 %v1243
        %v1283 = vpop.f32.mrb[0].mxu0
        %v1284 = vadd.f32 0.0, %v1283
        %v1285 = vpop.f32.mrb[0].mxu0
        %v1286 = vpop.f32.mrb[0].mxu0
        %v1287 = vpop.f32.mrb[0].mxu0
        %1288 = vdwg.mxu0
        %1289 = vrot.lane.b32.xlu0 %v956, 112
        %v1290 = vpop.permute.xlu0 %1289
        %v1292 = vsel %vm962, %v1237, 0
        %v1295 = vsel %vm1245, %v1290, 0
        %1297 = vmatprep.subr.bf16.mxu0 0
        %1298 = vmatpush1.bf16.msra.mxu0 %v1295
        %1299 = vmatprep.subr.bf16.mxu0 0
        %1300 = vmatpush1.bf16.msra.mxu0 0
        %1301 = vmatprep.subr.bf16.mxu0 0
        %1302 = vmatpush1.bf16.msra.mxu0 0
        %1303 = vmatprep.subr.bf16.mxu0 0
        %1304 = vmatpush1.bf16.msra.mxu0 0
        %1305 = vmatprep.subr.bf16.mxu0 0
        %1306 = vmatpush1.bf16.msra.mxu0 0
        %1307 = vmatprep.subr.bf16.mxu0 0
        %1308 = vmatpush1.bf16.msra.mxu0 0
        %1309 = vmatprep.subr.bf16.mxu0 0
        %1310 = vmatpush1.bf16.msra.mxu0 0
        %1311 = vmatprep.subr.bf16.mxu0 0
        %1312 = vmatpush1.bf16.msra.mxu0 0
        %1313 = vmatprep.subr.bf16.mxu0 0
        %1314 = vmatpush1.bf16.msra.mxu0 0
        %1315 = vmatprep.subr.bf16.mxu0 0
        %1316 = vmatpush1.bf16.msra.mxu0 0
        %1317 = vmatprep.subr.bf16.mxu0 0
        %1318 = vmatpush1.bf16.msra.mxu0 0
        %1319 = vmatprep.subr.bf16.mxu0 0
        %1320 = vmatpush1.bf16.msra.mxu0 0
        %1321 = vmatprep.subr.bf16.mxu0 0
        %1322 = vmatpush1.bf16.msra.mxu0 0
        %1323 = vmatprep.subr.bf16.mxu0 0
        %1324 = vmatpush1.bf16.msra.mxu0 0
        %1325 = vmatprep.subr.bf16.mxu0 0
        %1326 = vmatpush1.bf16.msra.mxu0 0
        %1327 = vmatprep.subr.bf16.mxu0 0
        %1328 = vmatpush1.bf16.msra.mxu0 0
        %1329 = vmatprep.mubr.bf16.mxu0 0
        %1330 = vmatmul.mubr.bf16.gmra.mrb[0].mxu0 %v1292
        %v1331 = vpop.f32.mrb[0].mxu0
        %v1332 = vadd.f32 0.0, %v1331
        %v1333 = vpop.f32.mrb[0].mxu0
        %v1334 = vpop.f32.mrb[0].mxu0
        %v1335 = vpop.f32.mrb[0].mxu0
        %1336 = vdwg.mxu0
        %1337 = vrot.lane.b32.xlu0 %v957, 112
        %v1338 = vpop.permute.xlu0 %1337
        %v1340 = vsel %vm962, %v1238, 0
        %v1343 = vsel %vm1245, %v1338, 0
        %1345 = vmatprep.subr.bf16.mxu0 0
        %1346 = vmatpush1.bf16.msra.mxu0 %v1343
        %1347 = vmatprep.subr.bf16.mxu0 0
        %1348 = vmatpush1.bf16.msra.mxu0 0
        %1349 = vmatprep.subr.bf16.mxu0 0
        %1350 = vmatpush1.bf16.msra.mxu0 0
        %1351 = vmatprep.subr.bf16.mxu0 0
        %1352 = vmatpush1.bf16.msra.mxu0 0
        %1353 = vmatprep.subr.bf16.mxu0 0
        %1354 = vmatpush1.bf16.msra.mxu0 0
        %1355 = vmatprep.subr.bf16.mxu0 0
        %1356 = vmatpush1.bf16.msra.mxu0 0
        %1357 = vmatprep.subr.bf16.mxu0 0
        %1358 = vmatpush1.bf16.msra.mxu0 0
        %1359 = vmatprep.subr.bf16.mxu0 0
        %1360 = vmatpush1.bf16.msra.mxu0 0
        %1361 = vmatprep.subr.bf16.mxu0 0
        %1362 = vmatpush1.bf16.msra.mxu0 0
        %1363 = vmatprep.subr.bf16.mxu0 0
        %1364 = vmatpush1.bf16.msra.mxu0 0
        %1365 = vmatprep.subr.bf16.mxu0 0
        %1366 = vmatpush1.bf16.msra.mxu0 0
        %1367 = vmatprep.subr.bf16.mxu0 0
        %1368 = vmatpush1.bf16.msra.mxu0 0
        %1369 = vmatprep.subr.bf16.mxu0 0
        %1370 = vmatpush1.bf16.msra.mxu0 0
        %1371 = vmatprep.subr.bf16.mxu0 0
        %1372 = vmatpush1.bf16.msra.mxu0 0
        %1373 = vmatprep.subr.bf16.mxu0 0
        %1374 = vmatpush1.bf16.msra.mxu0 0
        %1375 = vmatprep.subr.bf16.mxu0 0
        %1376 = vmatpush1.bf16.msra.mxu0 0
        %1377 = vmatprep.mubr.bf16.mxu0 0
        %1378 = vmatmul.mubr.bf16.gmra.mrb[0].mxu0 %v1340
        %v1379 = vpop.f32.mrb[0].mxu0
        %v1380 = vadd.f32 0.0, %v1379
        %v1381 = vpop.f32.mrb[0].mxu0
        %v1382 = vpop.f32.mrb[0].mxu0
        %v1383 = vpop.f32.mrb[0].mxu0
        %1384 = vdwg.mxu0
        %1385 = vrot.lane.b32.xlu0 %v958, 112
        %v1386 = vpop.permute.xlu0 %1385
        %v1388 = vsel %vm962, %v1239, 0
        %v1391 = vsel %vm1245, %v1386, 0
        %1393 = vmatprep.subr.bf16.mxu0 0
        %1394 = vmatpush1.bf16.msra.mxu0 %v1391
        %1395 = vmatprep.subr.bf16.mxu0 0
        %1396 = vmatpush1.bf16.msra.mxu0 0
        %1397 = vmatprep.subr.bf16.mxu0 0
        %1398 = vmatpush1.bf16.msra.mxu0 0
        %1399 = vmatprep.subr.bf16.mxu0 0
        %1400 = vmatpush1.bf16.msra.mxu0 0
        %1401 = vmatprep.subr.bf16.mxu0 0
        %1402 = vmatpush1.bf16.msra.mxu0 0
        %1403 = vmatprep.subr.bf16.mxu0 0
        %1404 = vmatpush1.bf16.msra.mxu0 0
        %1405 = vmatprep.subr.bf16.mxu0 0
        %1406 = vmatpush1.bf16.msra.mxu0 0
        %1407 = vmatprep.subr.bf16.mxu0 0
        %1408 = vmatpush1.bf16.msra.mxu0 0
        %1409 = vmatprep.subr.bf16.mxu0 0
        %1410 = vmatpush1.bf16.msra.mxu0 0
        %1411 = vmatprep.subr.bf16.mxu0 0
        %1412 = vmatpush1.bf16.msra.mxu0 0
        %1413 = vmatprep.subr.bf16.mxu0 0
        %1414 = vmatpush1.bf16.msra.mxu0 0
        %1415 = vmatprep.subr.bf16.mxu0 0
        %1416 = vmatpush1.bf16.msra.mxu0 0
        %1417 = vmatprep.subr.bf16.mxu0 0
        %1418 = vmatpush1.bf16.msra.mxu0 0
        %1419 = vmatprep.subr.bf16.mxu0 0
        %1420 = vmatpush1.bf16.msra.mxu0 0
        %1421 = vmatprep.subr.bf16.mxu0 0
        %1422 = vmatpush1.bf16.msra.mxu0 0
        %1423 = vmatprep.subr.bf16.mxu0 0
        %1424 = vmatpush1.bf16.msra.mxu0 0
        %1425 = vmatprep.mubr.bf16.mxu0 0
        %1426 = vmatmul.mubr.bf16.gmra.mrb[0].mxu0 %v1388
        %v1427 = vpop.f32.mrb[0].mxu0
        %v1428 = vadd.f32 0.0, %v1427
        %v1429 = vpop.f32.mrb[0].mxu0
        %v1430 = vpop.f32.mrb[0].mxu0
        %v1431 = vpop.f32.mrb[0].mxu0
        %1432 = vdwg.mxu0
        %v1433 = vpack.c.bf16 %v1284, %v1284
        %v1434 = vpack.c.bf16 %v1332, %v1332
        %v1435 = vpack.c.bf16 %v1380, %v1380
        %v1436 = vpack.c.bf16 %v1428, %v1428
        %v1437 = vld [vmem:[%s657] sm:$0xf]
        %v1438 = vld [vmem:[%s657 + $0x4] sm:$0xf]
        %v1439 = vld [vmem:[%s657 + $0x8] sm:$0xf]
        %v1440 = vld [vmem:[%s657 + $0xc] sm:$0xf]
        %v1442 = vsel %vm962, %v1433, 0
        %v1445 = vsel %vm1245, %v1437, 0
        %1447 = vmatprep.subr.bf16.mxu0 0
        %1448 = vmatpush1.bf16.msra.mxu0 %v1445
        %1449 = vmatprep.subr.bf16.mxu0 0
        %1450 = vmatpush1.bf16.msra.mxu0 0
        %1451 = vmatprep.subr.bf16.mxu0 0
        %1452 = vmatpush1.bf16.msra.mxu0 0
        %1453 = vmatprep.subr.bf16.mxu0 0
        %1454 = vmatpush1.bf16.msra.mxu0 0
        %1455 = vmatprep.subr.bf16.mxu0 0
        %1456 = vmatpush1.bf16.msra.mxu0 0
        %1457 = vmatprep.subr.bf16.mxu0 0
        %1458 = vmatpush1.bf16.msra.mxu0 0
        %1459 = vmatprep.subr.bf16.mxu0 0
        %1460 = vmatpush1.bf16.msra.mxu0 0
        %1461 = vmatprep.subr.bf16.mxu0 0
        %1462 = vmatpush1.bf16.msra.mxu0 0
        %1463 = vmatprep.subr.bf16.mxu0 0
        %1464 = vmatpush1.bf16.msra.mxu0 0
        %1465 = vmatprep.subr.bf16.mxu0 0
        %1466 = vmatpush1.bf16.msra.mxu0 0
        %1467 = vmatprep.subr.bf16.mxu0 0
        %1468 = vmatpush1.bf16.msra.mxu0 0
        %1469 = vmatprep.subr.bf16.mxu0 0
        %1470 = vmatpush1.bf16.msra.mxu0 0
        %1471 = vmatprep.subr.bf16.mxu0 0
        %1472 = vmatpush1.bf16.msra.mxu0 0
        %1473 = vmatprep.subr.bf16.mxu0 0
        %1474 = vmatpush1.bf16.msra.mxu0 0
        %1475 = vmatprep.subr.bf16.mxu0 0
        %1476 = vmatpush1.bf16.msra.mxu0 0
        %1477 = vmatprep.subr.bf16.mxu0 0
        %1478 = vmatpush1.bf16.msra.mxu0 0
        %1479 = vmatprep.mubr.bf16.mxu0 0
        %1480 = vmatmul.mubr.bf16.gmra.mrb[0].mxu0 %v1442
        %v1481 = vpop.f32.mrb[0].mxu0
        %v1482 = vadd.f32 0.0, %v1481
        %v1483 = vpop.f32.mrb[0].mxu0
        %v1484 = vpop.f32.mrb[0].mxu0
        %v1485 = vpop.f32.mrb[0].mxu0
        %1486 = vdwg.mxu0
        %v1488 = vsel %vm962, %v1434, 0
        %v1491 = vsel %vm1245, %v1438, 0
        %1493 = vmatprep.subr.bf16.mxu0 0
        %1494 = vmatpush1.bf16.msra.mxu0 %v1491
        %1495 = vmatprep.subr.bf16.mxu0 0
        %1496 = vmatpush1.bf16.msra.mxu0 0
        %1497 = vmatprep.subr.bf16.mxu0 0
        %1498 = vmatpush1.bf16.msra.mxu0 0
        %1499 = vmatprep.subr.bf16.mxu0 0
        %1500 = vmatpush1.bf16.msra.mxu0 0
        %1501 = vmatprep.subr.bf16.mxu0 0
        %1502 = vmatpush1.bf16.msra.mxu0 0
        %1503 = vmatprep.subr.bf16.mxu0 0
        %1504 = vmatpush1.bf16.msra.mxu0 0
        %1505 = vmatprep.subr.bf16.mxu0 0
        %1506 = vmatpush1.bf16.msra.mxu0 0
        %1507 = vmatprep.subr.bf16.mxu0 0
        %1508 = vmatpush1.bf16.msra.mxu0 0
        %1509 = vmatprep.subr.bf16.mxu0 0
        %1510 = vmatpush1.bf16.msra.mxu0 0
        %1511 = vmatprep.subr.bf16.mxu0 0
        %1512 = vmatpush1.bf16.msra.mxu0 0
        %1513 = vmatprep.subr.bf16.mxu0 0
        %1514 = vmatpush1.bf16.msra.mxu0 0
        %1515 = vmatprep.subr.bf16.mxu0 0
        %1516 = vmatpush1.bf16.msra.mxu0 0
        %1517 = vmatprep.subr.bf16.mxu0 0
        %1518 = vmatpush1.bf16.msra.mxu0 0
        %1519 = vmatprep.subr.bf16.mxu0 0
        %1520 = vmatpush1.bf16.msra.mxu0 0
        %1521 = vmatprep.subr.bf16.mxu0 0
        %1522 = vmatpush1.bf16.msra.mxu0 0
        %1523 = vmatprep.subr.bf16.mxu0 0
        %1524 = vmatpush1.bf16.msra.mxu0 0
        %1525 = vmatprep.mubr.bf16.mxu0 0
        %1526 = vmatmul.mubr.bf16.gmra.mrb[0].mxu0 %v1488
        %v1527 = vpop.f32.mrb[0].mxu0
        %v1528 = vadd.f32 0.0, %v1527
        %v1529 = vpop.f32.mrb[0].mxu0
        %v1530 = vpop.f32.mrb[0].mxu0
        %v1531 = vpop.f32.mrb[0].mxu0
        %1532 = vdwg.mxu0
        %v1534 = vsel %vm962, %v1435, 0
        %v1537 = vsel %vm1245, %v1439, 0
        %1539 = vmatprep.subr.bf16.mxu0 0
        %1540 = vmatpush1.bf16.msra.mxu0 %v1537
        %1541 = vmatprep.subr.bf16.mxu0 0
        %1542 = vmatpush1.bf16.msra.mxu0 0
        %1543 = vmatprep.subr.bf16.mxu0 0
        %1544 = vmatpush1.bf16.msra.mxu0 0
        %1545 = vmatprep.subr.bf16.mxu0 0
        %1546 = vmatpush1.bf16.msra.mxu0 0
        %1547 = vmatprep.subr.bf16.mxu0 0
        %1548 = vmatpush1.bf16.msra.mxu0 0
        %1549 = vmatprep.subr.bf16.mxu0 0
        %1550 = vmatpush1.bf16.msra.mxu0 0
        %1551 = vmatprep.subr.bf16.mxu0 0
        %1552 = vmatpush1.bf16.msra.mxu0 0
        %1553 = vmatprep.subr.bf16.mxu0 0
        %1554 = vmatpush1.bf16.msra.mxu0 0
        %1555 = vmatprep.subr.bf16.mxu0 0
        %1556 = vmatpush1.bf16.msra.mxu0 0
        %1557 = vmatprep.subr.bf16.mxu0 0
        %1558 = vmatpush1.bf16.msra.mxu0 0
        %1559 = vmatprep.subr.bf16.mxu0 0
        %1560 = vmatpush1.bf16.msra.mxu0 0
        %1561 = vmatprep.subr.bf16.mxu0 0
        %1562 = vmatpush1.bf16.msra.mxu0 0
        %1563 = vmatprep.subr.bf16.mxu0 0
        %1564 = vmatpush1.bf16.msra.mxu0 0
        %1565 = vmatprep.subr.bf16.mxu0 0
        %1566 = vmatpush1.bf16.msra.mxu0 0
        %1567 = vmatprep.subr.bf16.mxu0 0
        %1568 = vmatpush1.bf16.msra.mxu0 0
        %1569 = vmatprep.subr.bf16.mxu0 0
        %1570 = vmatpush1.bf16.msra.mxu0 0
        %1571 = vmatprep.mubr.bf16.mxu0 0
        %1572 = vmatmul.mubr.bf16.gmra.mrb[0].mxu0 %v1534
        %v1573 = vpop.f32.mrb[0].mxu0
        %v1574 = vadd.f32 0.0, %v1573
        %v1575 = vpop.f32.mrb[0].mxu0
        %v1576 = vpop.f32.mrb[0].mxu0
        %v1577 = vpop.f32.mrb[0].mxu0
        %1578 = vdwg.mxu0
        %v1580 = vsel %vm962, %v1436, 0
        %v1583 = vsel %vm1245, %v1440, 0
        %1585 = vmatprep.subr.bf16.mxu0 0
        %1586 = vmatpush1.bf16.msra.mxu0 %v1583
        %1587 = vmatprep.subr.bf16.mxu0 0
        %1588 = vmatpush1.bf16.msra.mxu0 0
        %1589 = vmatprep.subr.bf16.mxu0 0
        %1590 = vmatpush1.bf16.msra.mxu0 0
        %1591 = vmatprep.subr.bf16.mxu0 0
        %1592 = vmatpush1.bf16.msra.mxu0 0
        %1593 = vmatprep.subr.bf16.mxu0 0
        %1594 = vmatpush1.bf16.msra.mxu0 0
        %1595 = vmatprep.subr.bf16.mxu0 0
        %1596 = vmatpush1.bf16.msra.mxu0 0
        %1597 = vmatprep.subr.bf16.mxu0 0
        %1598 = vmatpush1.bf16.msra.mxu0 0
        %1599 = vmatprep.subr.bf16.mxu0 0
        %1600 = vmatpush1.bf16.msra.mxu0 0
        %1601 = vmatprep.subr.bf16.mxu0 0
        %1602 = vmatpush1.bf16.msra.mxu0 0
        %1603 = vmatprep.subr.bf16.mxu0 0
        %1604 = vmatpush1.bf16.msra.mxu0 0
        %1605 = vmatprep.subr.bf16.mxu0 0
        %1606 = vmatpush1.bf16.msra.mxu0 0
        %1607 = vmatprep.subr.bf16.mxu0 0
        %1608 = vmatpush1.bf16.msra.mxu0 0
        %1609 = vmatprep.subr.bf16.mxu0 0
        %1610 = vmatpush1.bf16.msra.mxu0 0
        %1611 = vmatprep.subr.bf16.mxu0 0
        %1612 = vmatpush1.bf16.msra.mxu0 0
        %1613 = vmatprep.subr.bf16.mxu0 0
        %1614 = vmatpush1.bf16.msra.mxu0 0
        %1615 = vmatprep.subr.bf16.mxu0 0
        %1616 = vmatpush1.bf16.msra.mxu0 0
        %1617 = vmatprep.mubr.bf16.mxu0 0
        %1618 = vmatmul.mubr.bf16.gmra.mrb[0].mxu0 %v1580
        %v1619 = vpop.f32.mrb[0].mxu0
        %v1620 = vadd.f32 0.0, %v1619
        %v1621 = vpop.f32.mrb[0].mxu0
        %v1622 = vpop.f32.mrb[0].mxu0
        %v1623 = vpop.f32.mrb[0].mxu0
        %1624 = vdwg.mxu0
        %v1625 = vsel %vm755, %v1482, 0.0
        %v1626 = vsel %vm755, %v1528, 0.0
        %v1627 = vadd.f32 %v1625, %v1626
        %v1628 = vsel %vm755, %v1574, 0.0
        %v1629 = vadd.f32 %v1627, %v1628
        %v1630 = vsel %vm755, %v1620, 0.0
        %v1631 = vadd.f32 %v1629, %v1630
        %v1632 = vld [vmem:[%s660] sm:$0x1]
        %v1634 = vlaneseq
        %v1635 = vshrl.u32 %v1634, 7
        %v1636 = vsub.s32 0, %v1635
        %v1637 = vrot.slane %v1632, %v1636
        %v1639 = vadd.f32 %v1631, %v1637
        %v1640 = vadd.f32 %v1639, %v697
        %v1641 = vld [vmem:[%s663] sm:$0x1]
        %v1642 = vld [vmem:[%s666] sm:$0x1]
        %v1643 = vsel %vm755, %v1640, 0.0
        %1644 = vadd.xlane.f32.xlu0 %v1643
        %v1645 = vpop.xlane.xlu0 %1644
        %v1646 = vrcp.pop 32.0
        %v1647 = vmul.f32 %v1645, %v1646
        %v1648 = vsub.f32 %v1640, %v1647
        %v1649 = vmul.f32 %v1648, %v1648
        %v1650 = vsel %vm755, %v1649, 0.0
        %1651 = vadd.xlane.f32.xlu0 %v1650
        %v1652 = vpop.xlane.xlu0 %1651
        %v1653 = vmul.f32 %v1652, %v1646
        %v1654 = vadd.f32 %v1653, 1e-12
        %v1655 = vrsqrt.pop %v1654
        %v1656 = vmul.f32 %v1648, %v1655
        %v1658 = vlaneseq
        %v1659 = vshrl.u32 %v1658, 7
        %v1660 = vsub.s32 0, %v1659
        %v1661 = vrot.slane %v1641, %v1660
        %v1663 = vmul.f32 %v1656, %v1661
        %v1665 = vlaneseq
        %v1666 = vshrl.u32 %v1665, 7
        %v1667 = vsub.s32 0, %v1666
        %v1668 = vrot.slane %v1642, %v1667
        %v1670 = vadd.f32 %v1663, %v1668
        %v1671 = vpack.c.bf16 %v1670, %v1670
        %v1672 = vld [vmem:[%s671] sm:$0xf]
        %v1673 = vld [vmem:[%s671 + $0x4] sm:$0xf]
        %v1674 = vld [vmem:[%s671 + $0x8] sm:$0xf]
        %v1675 = vld [vmem:[%s671 + $0xc] sm:$0xf]
        %v1676 = vld [vmem:[%s674] sm:$0x1]
        %v1678 = vlaneseq
        %v1679 = vshrl.u32 %v1678, 7
        %v1680 = vsub.s32 0, %v1679
        %v1681 = vrot.slane %v1676, %v1680
        %v1687 = vunpack.c.l.b16 %v1672
        %v1688 = vunpack.c.l.b16 %v1673
        %v1689 = vunpack.c.l.b16 %v1674
        %v1690 = vunpack.c.l.b16 %v1675
        %v1691 = vpack.c.b16 %v1688, %v1687
        %v1692 = vpack.c.b16 %v1690, %v1689
        %v1696 = vsel %vm755, %v1671, 0
        %1698 = vmatprep.subr.bf16.mxu0 0
        %1699 = vmatpush1.bf16.msra.mxu0 %v1691
        %1700 = vmatprep.subr.bf16.mxu0 0
        %1701 = vmatpush1.bf16.msra.mxu0 %v1692
        %1702 = vmatprep.subr.bf16.mxu0 0
        %1703 = vmatpush1.bf16.msra.mxu0 0
        %1704 = vmatprep.subr.bf16.mxu0 0
        %1705 = vmatpush1.bf16.msra.mxu0 0
        %1706 = vmatprep.subr.bf16.mxu0 0
        %1707 = vmatpush1.bf16.msra.mxu0 0
        %1708 = vmatprep.subr.bf16.mxu0 0
        %1709 = vmatpush1.bf16.msra.mxu0 0
        %1710 = vmatprep.subr.bf16.mxu0 0
        %1711 = vmatpush1.bf16.msra.mxu0 0
        %1712 = vmatprep.subr.bf16.mxu0 0
        %1713 = vmatpush1.bf16.msra.mxu0 0
        %1714 = vmatprep.subr.bf16.mxu0 0
        %1715 = vmatpush1.bf16.msra.mxu0 0
        %1716 = vmatprep.subr.bf16.mxu0 0
        %1717 = vmatpush1.bf16.msra.mxu0 0
        %1718 = vmatprep.subr.bf16.mxu0 0
        %1719 = vmatpush1.bf16.msra.mxu0 0
        %1720 = vmatprep.subr.bf16.mxu0 0
        %1721 = vmatpush1.bf16.msra.mxu0 0
        %1722 = vmatprep.subr.bf16.mxu0 0
        %1723 = vmatpush1.bf16.msra.mxu0 0
        %1724 = vmatprep.subr.bf16.mxu0 0
        %1725 = vmatpush1.bf16.msra.mxu0 0
        %1726 = vmatprep.subr.bf16.mxu0 0
        %1727 = vmatpush1.bf16.msra.mxu0 0
        %1728 = vmatprep.subr.bf16.mxu0 0
        %1729 = vmatpush1.bf16.msra.mxu0 0
        %1730 = vmatprep.mubr.bf16.mxu0 0
        %1731 = vmatmul.mubr.bf16.gmra.mrb[0].mxu0 %v1696
        %v1732 = vpop.f32.mrb[0].mxu0
        %v1733 = vadd.f32 %v1681, %v1732
        %v1734 = vpop.f32.mrb[0].mxu0
        %v1735 = vpop.f32.mrb[0].mxu0
        %v1736 = vpop.f32.mrb[0].mxu0
        %1737 = vdwg.mxu0
        %v1738 = vmul.f32 %v1733, 0.5
        %v1739 = vmul.f32 %v1733, 0.044715
        %v1740 = vmul.f32 %v1739, %v1733
        %v1741 = vmul.f32 %v1740, %v1733
        %v1742 = vadd.f32 %v1733, %v1741
        %v1743 = vmul.f32 %v1742, 0.7978846
        %v1744 = vtanh.pop %v1743
        %v1745 = vadd.f32 %v1744, 1.0
        %v1746 = vmul.f32 %v1738, %v1745
        %v1747 = vpack.c.bf16 %v1746, %v1746
        %v1748 = vld [vmem:[%s679] sm:$0xf]
        %v1749 = vld [vmem:[%s679 + $0x4] sm:$0xf]
        %v1750 = vld [vmem:[%s679 + $0x8] sm:$0xf]
        %v1751 = vld [vmem:[%s679 + $0xc] sm:$0xf]
        %v1752 = vld [vmem:[%s679 + $0x10] sm:$0xf]
        %v1753 = vld [vmem:[%s679 + $0x14] sm:$0xf]
        %v1754 = vld [vmem:[%s679 + $0x18] sm:$0xf]
        %v1755 = vld [vmem:[%s679 + $0x1c] sm:$0xf]
        %v1756 = vld [vmem:[%s679 + $0x20] sm:$0xf]
        %v1757 = vld [vmem:[%s679 + $0x24] sm:$0xf]
        %v1758 = vld [vmem:[%s679 + $0x28] sm:$0xf]
        %v1759 = vld [vmem:[%s679 + $0x2c] sm:$0xf]
        %v1760 = vld [vmem:[%s679 + $0x30] sm:$0xf]
        %v1761 = vld [vmem:[%s679 + $0x34] sm:$0xf]
        %v1762 = vld [vmem:[%s679 + $0x38] sm:$0xf]
        %v1763 = vld [vmem:[%s679 + $0x3c] sm:$0xf]
        %v1764 = vld [vmem:[%s682] sm:$0x1]
        %v1766 = vlaneseq
        %v1767 = vshrl.u32 %v1766, 7
        %v1768 = vsub.s32 0, %v1767
        %v1769 = vrot.slane %v1764, %v1768
        %v1787 = vunpack.c.l.b16 %v1748
        %v1788 = vunpack.c.l.b16 %v1749
        %v1789 = vunpack.c.l.b16 %v1750
        %v1790 = vunpack.c.l.b16 %v1751
        %v1791 = vunpack.c.l.b16 %v1752
        %v1792 = vunpack.c.l.b16 %v1753
        %v1793 = vunpack.c.l.b16 %v1754
        %v1794 = vunpack.c.l.b16 %v1755
        %v1795 = vunpack.c.l.b16 %v1756
        %v1796 = vunpack.c.l.b16 %v1757
        %v1797 = vunpack.c.l.b16 %v1758
        %v1798 = vunpack.c.l.b16 %v1759
        %v1799 = vunpack.c.l.b16 %v1760
        %v1800 = vunpack.c.l.b16 %v1761
        %v1801 = vunpack.c.l.b16 %v1762
        %v1802 = vunpack.c.l.b16 %v1763
        %v1803 = vpack.c.b16 %v1788, %v1787
        %v1804 = vpack.c.b16 %v1790, %v1789
        %v1805 = vpack.c.b16 %v1792, %v1791
        %v1806 = vpack.c.b16 %v1794, %v1793
        %v1807 = vpack.c.b16 %v1796, %v1795
        %v1808 = vpack.c.b16 %v1798, %v1797
        %v1809 = vpack.c.b16 %v1800, %v1799
        %v1810 = vpack.c.b16 %v1802, %v1801
        %1819 = vmatprep.subr.bf16.mxu0 0
        %1820 = vmatpush1.bf16.msra.mxu0 %v1803
        %1821 = vmatprep.subr.bf16.mxu0 0
        %1822 = vmatpush1.bf16.msra.mxu0 %v1804
        %1823 = vmatprep.subr.bf16.mxu0 0
        %1824 = vmatpush1.bf16.msra.mxu0 %v1805
        %1825 = vmatprep.subr.bf16.mxu0 0
        %1826 = vmatpush1.bf16.msra.mxu0 %v1806
        %1827 = vmatprep.subr.bf16.mxu0 0
        %1828 = vmatpush1.bf16.msra.mxu0 %v1807
        %1829 = vmatprep.subr.bf16.mxu0 0
        %1830 = vmatpush1.bf16.msra.mxu0 %v1808
        %1831 = vmatprep.subr.bf16.mxu0 0
        %1832 = vmatpush1.bf16.msra.mxu0 %v1809
        %1833 = vmatprep.subr.bf16.mxu0 0
        %1834 = vmatpush1.bf16.msra.mxu0 %v1810
        %1835 = vmatprep.subr.bf16.mxu0 0
        %1836 = vmatpush1.bf16.msra.mxu0 0
        %1837 = vmatprep.subr.bf16.mxu0 0
        %1838 = vmatpush1.bf16.msra.mxu0 0
        %1839 = vmatprep.subr.bf16.mxu0 0
        %1840 = vmatpush1.bf16.msra.mxu0 0
        %1841 = vmatprep.subr.bf16.mxu0 0
        %1842 = vmatpush1.bf16.msra.mxu0 0
        %1843 = vmatprep.subr.bf16.mxu0 0
        %1844 = vmatpush1.bf16.msra.mxu0 0
        %1845 = vmatprep.subr.bf16.mxu0 0
        %1846 = vmatpush1.bf16.msra.mxu0 0
        %1847 = vmatprep.subr.bf16.mxu0 0
        %1848 = vmatpush1.bf16.msra.mxu0 0
        %1849 = vmatprep.subr.bf16.mxu0 0
        %1850 = vmatpush1.bf16.msra.mxu0 0
        %1851 = vmatprep.mubr.bf16.mxu0 0
        %1852 = vmatmul.mubr.bf16.gmra.mrb[0].mxu0 %v1747
        %v1853 = vpop.f32.mrb[0].mxu0
        %v1854 = vadd.f32 %v1769, %v1853
        %v1855 = vpop.f32.mrb[0].mxu0
        %v1856 = vpop.f32.mrb[0].mxu0
        %v1857 = vpop.f32.mrb[0].mxu0
        %1858 = vdwg.mxu0
        %v1859 = vadd.f32 %v1854, %v1670
        %v1860 = vld [vmem:[%s685] sm:$0x1]
        %v1861 = vld [vmem:[%s688] sm:$0x1]
        %v1862 = vsel %vm755, %v1859, 0.0
        %1863 = vadd.xlane.f32.xlu0 %v1862
        %v1864 = vpop.xlane.xlu0 %1863
        %v1865 = vmul.f32 %v1864, %v1646
        %v1866 = vsub.f32 %v1859, %v1865
        %v1867 = vmul.f32 %v1866, %v1866
        %v1868 = vsel %vm755, %v1867, 0.0
        %1869 = vadd.xlane.f32.xlu0 %v1868
        %v1870 = vpop.xlane.xlu0 %1869
        %v1871 = vmul.f32 %v1870, %v1646
        %v1872 = vadd.f32 %v1871, 1e-12
        %v1873 = vrsqrt.pop %v1872
        %v1874 = vmul.f32 %v1866, %v1873
        %v1876 = vlaneseq
        %v1877 = vshrl.u32 %v1876, 7
        %v1878 = vsub.s32 0, %v1877
        %v1879 = vrot.slane %v1860, %v1878
        %v1881 = vmul.f32 %v1874, %v1879
        %v1883 = vlaneseq
        %v1884 = vshrl.u32 %v1883, 7
        %v1885 = vsub.s32 0, %v1884
        %v1886 = vrot.slane %v1861, %v1885
        %v1888 = vadd.f32 %v1881, %v1886
        %1889 = vst.msk [vmem:[#allocation2] sm:$0xff] %vm755, %v1888
        %v1891 = vrot.slane %v1888, 2
        %1892 = vrot.lane.b32.xlu0 %v1891, 32
        %v1893 = vpop.permute.xlu0 %1892
        %v1895 = vrot.slane %v1888, 4
        %1896 = vrot.lane.b32.xlu0 %v1895, 64
        %v1897 = vpop.permute.xlu0 %1896
        %v1899 = vrot.slane %v1888, 6
        %1900 = vrot.lane.b32.xlu0 %v1899, 96
        %v1901 = vpop.permute.xlu0 %1900
        %v1903 = vsel %vm755, %v1888, %v1893
        %vm1904 = vcmask 523264
        %v1905 = vsel %vm1904, %v1903, %v1897
        %vm1906 = vcmask 785408
        %v1907 = vsel %vm1906, %v1905, %v1901
        %1908 = vst [vmem:[%s635] sm:$0x3] %v1907
        %s1909 = sand.u32 %s414, 1
        %s1910 = scalar_lea.sflag [#allocation4], %s1909
        %s1911 = sand.u32 %s414, 1
        %s1912 = smul.addr %s1911, 2
        %s1913 = scalar_lea.vmem [#allocation3], %s1912
        // Predicated region
        $region81: #{tpu_custom_call.1} parent=75 // pred_check
          %p1914 = pneg %p424
        $region82: #{tpu_custom_call.1} parent=75 // pred_check_branch
          %1916 = sbr.rel (%p1914) target = $region84
        $region83: #{tpu_custom_call.1} parent=75 // pred_region
          %s1918 = ssub.s32 32, 32
          %1919 = vsyncadd %s1910, %s1918
          %s1920 = smul.addr %s33, 2
          %s1921 = sadd.s32 %s32, %s1920
          %s1922 = smul.addr %s1921, 32
          %s1923 = scalar_lea.hbm %s14, %s1922
          %s1925 = sshll.u32 %s1913, 4
          %s1926 = int_to_ptr.vmem [resolvable:$true] %s1925
          %1928 = dma.vmem_to_hbm [thread:$0]  %s1926, 32, %s1923, %s1910
        $region84: #{tpu_custom_call.1} parent=75 // pred_fallthru
          _
      $region76: #{tpu_custom_call.1} parent=5 // pred_fallthru
        _
      %p1929 = scmp.le.s32.totalorder 2, %s23
      // Predicated region
      $region85: #{tpu_custom_call.1} parent=5 // pred_check
        %p1930 = pneg %p1929
      $region86: #{tpu_custom_call.1} parent=5 // pred_check_branch
        %1932 = sbr.rel (%p1930) target = $region88
      $region87: #{tpu_custom_call.1} parent=5 // pred_region
        %s1933 = ssub.s32 %s23, 2
        // Predicated region
        $region89: #{tpu_custom_call.1} parent=87 // pred_check
          %p1934 = pneg %p430
        $region90: #{tpu_custom_call.1} parent=87 // pred_check_branch
          %1936 = sbr.rel (%p1934) target = $region92
        $region91: #{tpu_custom_call.1} parent=87 // pred_region
          %s1937 = sand.u32 %s415, 1
          %s1938 = scalar_lea.sflag [#allocation4], %s1937
          %s1939 = sand.u32 %s415, 1
          %s1940 = smul.addr %s1939, 2
          %s1941 = scalar_lea.vmem [#allocation3], %s1940
          %1942 = dma.done %s1938, 32
        $region92: #{tpu_custom_call.1} parent=87 // pred_fallthru
          _
      $region88: #{tpu_custom_call.1} parent=5 // pred_fallthru
        _
    $region6: #{tpu_custom_call.1} parent=1 // loop_footer
      %s27 = sadd.s32 1, %s23
    $region7: #{tpu_custom_call.1} parent=1 // loop_footer_branch
      %22 = sbr.rel target = $region3
    $region8: #{tpu_custom_call.1} parent=1 // loop_exit
      _
    %1943 = vsyncpa [#allocation4], 1
    %s1944 = scalar_lea.sflag [#allocation4], 1
    %1945 = vsyncpa %s1944, 1

</llo_original>
